<compile_context>
chip_gen: v7x
topology: tpu7x:2x2x1
jax: 0.10.0
libtpu: 0.0.40
codegen_flags: <defaults>
</compile_context>

<pallas_src>
import functools

import jax
import jax.numpy as jnp
from jax.experimental import pallas as pl
from jax.experimental.pallas import tpu as pltpu

# ----- "Args" (synthetic, small) -------------------------------------------
FEATURE_DIM = 32            # arg.feature_dim
DILATIONS = (1, 2)          # arg.dilation
FILTERS = FEATURE_DIM       # arg.filters (== feature_dim, see TODO above)
KERNEL_SIZE = 3             # arg.kernel_size
DROP_RATE = 0.1             # arg.drop_rate (dropout = identity at inference)
SEQ_LEN = 16
BATCH = 2

NC_MAX = 8                                  # classifier heads padded to 8 classes
HEAD_CONFIGS = ((6, 0.0), (6, 0.0), (8, 0.1))   # (num_classes, label_smoothing)
PAD_ROWS = 8                                # sublane-aligned causal-pad staging rows
OUT_LANES = 128                             # lane-dense packed (loss, correct) row

assert FILTERS == FEATURE_DIM
assert PAD_ROWS >= (KERNEL_SIZE - 1) * max(DILATIONS)


# ----- fused Pallas kernel: conv stack + classifier head(s) -----------------
def _fused_forward_kernel(x_ref, cw_ref, cb_ref, wh_ref, bh_ref, yoh_ref,
                          out_ref, hpad_ref, xcol_ref, *, dilations, heads):
    # x_ref  : (N, L, C)            activations, channel-last (C on lanes)
    # cw_ref : (n_layers, K*C, C)   im2col-flattened conv weights
    # cb_ref : (n_layers, 1, C)     conv biases
    # wh_ref : (H, C, NC_MAX)       classifier weights (padded classes)
    # bh_ref : (H, 1, NC_MAX)       classifier biases  (padded classes)
    # yoh_ref: (H, N, NC_MAX)       one-hot labels
    # out_ref: (H, 128)             lane 0 = loss, lane 1 = correct_num
    # hpad_ref: (N, PAD_ROWS+L, C)  VMEM causal-pad staging scratch
    # xcol_ref: (N*L, K*C)          VMEM im2col scratch
    N, L, C = x_ref.shape
    K = cw_ref.shape[1] // C
    NL = N * L
    NCMAX = wh_ref.shape[-1]

    # zero the causal left-pad staging rows once (they stay zero across layers)
    hpad_ref[...] = jnp.zeros(hpad_ref.shape, jnp.float32)

    def causal_conv_relu(h_nlc, layer):
        dilation = dilations[layer]
        pad = (K - 1) * dilation
        # in-kernel causal left-pad: data lives at rows [PAD_ROWS:], zeros before
        hpad_ref[:, PAD_ROWS:, :] = h_nlc
        hp = hpad_ref[...]
        # im2col: gather the K dilated taps side by side -> single MXU matmul
        for k in range(K):
            off = PAD_ROWS - pad + k * dilation        # == x_pad[l + k*d]
            xcol_ref[:, k * C:(k + 1) * C] = hp[:, off:off + L, :].reshape(NL, C)
        acc = jnp.dot(xcol_ref[...], cw_ref[layer],
                      preferred_element_type=jnp.float32) + cb_ref[layer]
        # ReLU; dropout = identity (inference)
        return jnp.maximum(acc, 0.0).reshape(N, L, C)

    h = x_ref[...].astype(jnp.float32)
    for layer in range(len(dilations)):
        h = causal_conv_relu(h, layer)

    # classifier trunk: AdaptiveAvgPool1d(1) + flatten -> (N, C); dropout = id.
    pooled = jnp.mean(h, axis=1)

    col = jax.lax.broadcasted_iota(jnp.int32, (N, NCMAX), 1)
    out_lane = jax.lax.broadcasted_iota(jnp.int32, (1, OUT_LANES), 1)

    for hidx, (nc, ls) in enumerate(heads):
        logits = (jnp.dot(pooled, wh_ref[hidx],
                          preferred_element_type=jnp.float32) + bh_ref[hidx])
        valid = col < nc                               # mask padded class columns
        logits = jnp.where(valid, logits, -1e30)
        yoh = yoh_ref[hidx]

        # cross-entropy (optional label smoothing), mean over batch
        m = jnp.max(logits, axis=-1, keepdims=True)
        z = logits - m
        lse = jnp.log(jnp.sum(jnp.exp(z), axis=-1, keepdims=True))
        logp = z - lse
        tgt = jnp.where(valid, (1.0 - ls) * yoh + ls / nc, 0.0)
        per_ex = -jnp.sum(tgt * logp, axis=-1, keepdims=True)       # (N, 1)
        loss = jnp.sum(per_ex, axis=0, keepdims=True) / N           # (1, 1)

        # accuracy_cal: count of (first-)argmax(logits) == y
        is_max = logits == m
        pred = jnp.min(jnp.where(is_max, col, NCMAX), axis=-1, keepdims=True)
        correct_per = jnp.sum(jnp.where(col == pred, yoh, 0.0),
                              axis=-1, keepdims=True)               # (N, 1)
        correct = jnp.sum(correct_per, axis=0, keepdims=True)       # (1, 1)

        # pack both scalars into one lane-dense 128-wide output row
        row = (jnp.where(out_lane == 0, loss, 0.0)
               + jnp.where(out_lane == 1, correct, 0.0))
        out_ref[hidx:hidx + 1, :] = row


def _whole_array_spec(a):
    nd = a.ndim
    return pl.BlockSpec(a.shape, lambda *_, _nd=nd: (0,) * _nd)


def _run_fused(x_nlc, params, wh, bh, yoh, heads):
    N, L, C = x_nlc.shape
    H = len(heads)
    kern = functools.partial(_fused_forward_kernel,
                             dilations=DILATIONS, heads=tuple(heads))
    args = (x_nlc, params["conv_w"], params["conv_b"], wh, bh, yoh)
    return pl.pallas_call(
        kern,
        out_shape=jax.ShapeDtypeStruct((H, OUT_LANES), jnp.float32),
        in_specs=[_whole_array_spec(a) for a in args],
        out_specs=pl.BlockSpec((H, OUT_LANES), lambda *_: (0, 0)),
        scratch_shapes=[
            pltpu.VMEM((N, PAD_ROWS + L, C), jnp.float32),      # causal-pad stage
            pltpu.VMEM((N * L, KERNEL_SIZE * C), jnp.float32),  # im2col buffer
        ],
    )(*args)


# ----- public forward (mirrors MultiDataset_3.forward) ----------------------
@functools.partial(jax.jit, static_argnames=("index",))
def multi_dataset3_forward(params, x_ncl, y, index):
    """MultiDataset_3.forward(x, y, index) -> (loss, correct_num). One pallas_call."""
    if index not in (1, 2, 3):
        raise ValueError("index must be 1, 2 or 3")
    # NCL -> NLC (glue); negligible here, foldable into the first matmul at scale
    x_nlc = jnp.transpose(x_ncl, (0, 2, 1)).astype(jnp.float32)
    nc, ls = HEAD_CONFIGS[index - 1]
    wh = params["cls_w"][index - 1:index]                         # (1, C, NC_MAX)
    bh = params["cls_b"][index - 1:index]                         # (1, 1, NC_MAX)
    yoh = jax.nn.one_hot(y, NC_MAX, dtype=jnp.float32)[None]      # (1, N, NC_MAX)
    out = _run_fused(x_nlc, params, wh, bh, yoh, heads=((nc, ls),))
    return out[0, 0], out[0, 1]


@jax.jit
def multi_dataset3_forward_all(params, x_ncl, y1, y2, y3):
    """Shared-feature path: shareNet computed ONCE, all 3 heads in one pallas_call."""
    x_nlc = jnp.transpose(x_ncl, (0, 2, 1)).astype(jnp.float32)
    yoh = jnp.stack([jax.nn.one_hot(y1, NC_MAX, dtype=jnp.float32),
                     jax.nn.one_hot(y2, NC_MAX, dtype=jnp.float32),
                     jax.nn.one_hot(y3, NC_MAX, dtype=jnp.float32)])
    out = _run_fused(x_nlc, params, params["cls_w"], params["cls_b"], yoh,
                     heads=HEAD_CONFIGS)
    return tuple((out[i, 0], out[i, 1]) for i in range(len(HEAD_CONFIGS)))


# ----- parameter init (deterministic, PyTorch-like uniform fan-in) ----------
def init_params(key):
    ks = jax.random.split(key, 2 * len(DILATIONS) + 2 * len(HEAD_CONFIGS))
    i = 0
    conv_w, conv_b = [], []
    cin = FEATURE_DIM
    for _ in DILATIONS:
        bound = 1.0 / float(cin * KERNEL_SIZE) ** 0.5
        w = jax.random.uniform(ks[i], (KERNEL_SIZE, cin, FILTERS),
                               jnp.float32, -bound, bound); i += 1
        conv_w.append(w.reshape(KERNEL_SIZE * cin, FILTERS))   # im2col-flattened
        conv_b.append(jax.random.uniform(ks[i], (1, FILTERS),
                                         jnp.float32, -bound, bound)); i += 1
        cin = FILTERS
    cls_w, cls_b = [], []
    for nc, _ in HEAD_CONFIGS:
        bound = 1.0 / float(FEATURE_DIM) ** 0.5
        w = jax.random.uniform(ks[i], (FEATURE_DIM, nc),
                               jnp.float32, -bound, bound); i += 1
        b = jax.random.uniform(ks[i], (1, nc), jnp.float32, -bound, bound); i += 1
        cls_w.append(jnp.pad(w, ((0, 0), (0, NC_MAX - nc))))   # pad classes to 8
        cls_b.append(jnp.pad(b, ((0, 0), (0, NC_MAX - nc))))
    return {"conv_w": jnp.stack(conv_w),   # (n_layers, K*C, C)
            "conv_b": jnp.stack(conv_b),   # (n_layers, 1, C)
            "cls_w": jnp.stack(cls_w),     # (3, C, NC_MAX)
            "cls_b": jnp.stack(cls_b)}     # (3, 1, NC_MAX)


# ----- pure-JAX reference (for numerical validation only) -------------------
def _reference_forward(params, x_ncl, y, index):
    x = jnp.transpose(x_ncl, (0, 2, 1)).astype(jnp.float32)    # (N, L, C)
    N, L, C = x.shape
    h = x
    for li, d in enumerate(DILATIONS):
        w = params["conv_w"][li].reshape(KERNEL_SIZE, C, C)
        b = params["conv_b"][li]
        pad = (KERNEL_SIZE - 1) * d
        hp = jnp.pad(h, ((0, 0), (pad, 0), (0, 0)))
        acc = jnp.zeros((N, L, C), jnp.float32)
        for k in range(KERNEL_SIZE):
            acc = acc + jnp.einsum("nlc,cm->nlm", hp[:, k * d:k * d + L, :], w[k])
        h = jnp.maximum(acc + b, 0.0)
    pooled = jnp.mean(h, axis=1)
    nc, ls = HEAD_CONFIGS[index - 1]
    wc = params["cls_w"][index - 1][:, :nc]
    bc = params["cls_b"][index - 1][:, :nc]
    logits = pooled @ wc + bc
    logp = jax.nn.log_softmax(logits, axis=-1)
    tgt = (1.0 - ls) * jax.nn.one_hot(y, nc, dtype=jnp.float32) + ls / nc
    loss = -jnp.sum(tgt * logp, axis=-1).mean()
    correct = jnp.sum((jnp.argmax(logits, axis=-1) == y).astype(jnp.float32))
    return loss, correct


if __name__ == "__main__":
    key = jax.random.PRNGKey(0)
    kp, kx, ky1, ky3 = jax.random.split(key, 4)
    params = init_params(kp)

    x = jax.random.normal(kx, (BATCH, FEATURE_DIM, SEQ_LEN), jnp.float32)  # NCL
    y1 = jax.random.randint(ky1, (BATCH,), 0, 6)   # dataset 1/2 labels (6 classes)
    y3 = jax.random.randint(ky3, (BATCH,), 0, 8)   # dataset 3 labels (8 classes)

    # shared-feature fused path: conv stack once + all 3 heads in one kernel
    results_all = multi_dataset3_forward_all(params, x, y1, y1, y3)
    # module-faithful per-index forward (single fused kernel per call)
    l1, c1 = multi_dataset3_forward(params, x, y1, index=1)
    l3, c3 = multi_dataset3_forward(params, x, y3, index=3)

    jax.block_until_ready((results_all, l1, c1, l3, c3))

    # validate against pure-JAX reference
    ok = True
    labels = (y1, y1, y3)
    for hidx, (lk, ck) in enumerate(results_all):
        lr, cr = _reference_forward(params, x, labels[hidx], hidx + 1)
        ok &= bool(jnp.allclose(lk, lr, atol=1e-3, rtol=1e-3))
        ok &= bool(jnp.allclose(ck, cr, atol=1e-3))
    lr1, cr1 = _reference_forward(params, x, y1, 1)
    lr3, cr3 = _reference_forward(params, x, y3, 3)
    ok &= bool(jnp.allclose(l1, lr1, atol=1e-3, rtol=1e-3))
    ok &= bool(jnp.allclose(c1, cr1, atol=1e-3))
    ok &= bool(jnp.allclose(l3, lr3, atol=1e-3, rtol=1e-3))
    ok &= bool(jnp.allclose(c3, cr3, atol=1e-3))
    if not ok:
        raise SystemExit("numerical mismatch vs pure-JAX reference")

    print("KERNEL_OK")
</pallas_src>

<mosaic_0001>
module attributes {stable_mosaic.version = 11 : i64} {
  func.func @_fused_forward_kernel(%arg0: memref<2x16x32xf32, #tpu.memory_space<vmem>>, %arg1: memref<2x96x32xf32, #tpu.memory_space<vmem>>, %arg2: memref<2x1x32xf32, #tpu.memory_space<vmem>>, %arg3: memref<3x32x8xf32, #tpu.memory_space<vmem>>, %arg4: memref<3x1x8xf32, #tpu.memory_space<vmem>>, %arg5: memref<3x2x8xf32, #tpu.memory_space<vmem>>, %arg6: memref<3x128xf32, #tpu.memory_space<vmem>>, %arg7: memref<2x24x32xf32, #tpu.memory_space<vmem>>, %arg8: memref<32x96xf32, #tpu.memory_space<vmem>>) attributes {dimension_semantics = [], scalar_prefetch = 0 : i64, scratch_operands = 2 : i64, tpu.core_type = #tpu.core_type<tc>} {
    %cst = arith.constant 0.000000e+00 : f32
    %0 = vector.broadcast %cst : f32 to vector<2x24x32xf32>
    %c0 = arith.constant 0 : index
    %c0_0 = arith.constant 0 : index
    %c0_1 = arith.constant 0 : index
    %1 = vector.load %arg7[%c0, %c0_0, %c0_1] : memref<2x24x32xf32, #tpu.memory_space<vmem>>, vector<2x24x32xf32>
    tpu.vector_store %arg7[%c0, %c0_0, %c0_1], %0 {strides = array<i32>} : memref<2x24x32xf32, #tpu.memory_space<vmem>>, vector<2x24x32xf32>,
    %c0_2 = arith.constant 0 : index
    %c0_3 = arith.constant 0 : index
    %c0_4 = arith.constant 0 : index
    %2 = vector.load %arg0[%c0_2, %c0_3, %c0_4] : memref<2x16x32xf32, #tpu.memory_space<vmem>>, vector<2x16x32xf32>
    %c0_5 = arith.constant 0 : index
    %c8 = arith.constant 8 : index
    %c0_6 = arith.constant 0 : index
    %3 = vector.load %arg7[%c0_5, %c8, %c0_6] : memref<2x24x32xf32, #tpu.memory_space<vmem>>, vector<2x16x32xf32>
    tpu.vector_store %arg7[%c0_5, %c8, %c0_6], %2 {strides = array<i32>} : memref<2x24x32xf32, #tpu.memory_space<vmem>>, vector<2x16x32xf32>,
    %c0_7 = arith.constant 0 : index
    %c0_8 = arith.constant 0 : index
    %c0_9 = arith.constant 0 : index
    %4 = vector.load %arg7[%c0_7, %c0_8, %c0_9] : memref<2x24x32xf32, #tpu.memory_space<vmem>>, vector<2x24x32xf32>
    %5 = vector.extract_strided_slice %4 {offsets = [0, 6, 0], sizes = [2, 16, 32], strides = [1, 1, 1]} : vector<2x24x32xf32> to vector<2x16x32xf32>
    %6 = vector.shape_cast %5 : vector<2x16x32xf32> to vector<32x32xf32>
    %c0_10 = arith.constant 0 : index
    %c0_11 = arith.constant 0 : index
    %7 = vector.load %arg8[%c0_10, %c0_11] : memref<32x96xf32, #tpu.memory_space<vmem>>, vector<32x32xf32>
    tpu.vector_store %arg8[%c0_10, %c0_11], %6 {strides = array<i32>} : memref<32x96xf32, #tpu.memory_space<vmem>>, vector<32x32xf32>,
    %8 = vector.extract_strided_slice %4 {offsets = [0, 7, 0], sizes = [2, 16, 32], strides = [1, 1, 1]} : vector<2x24x32xf32> to vector<2x16x32xf32>
    %9 = vector.shape_cast %8 : vector<2x16x32xf32> to vector<32x32xf32>
    %c0_12 = arith.constant 0 : index
    %c32 = arith.constant 32 : index
    %10 = vector.load %arg8[%c0_12, %c32] : memref<32x96xf32, #tpu.memory_space<vmem>>, vector<32x32xf32>
    tpu.vector_store %arg8[%c0_12, %c32], %9 {strides = array<i32>} : memref<32x96xf32, #tpu.memory_space<vmem>>, vector<32x32xf32>,
    %11 = vector.extract_strided_slice %4 {offsets = [0, 8, 0], sizes = [2, 16, 32], strides = [1, 1, 1]} : vector<2x24x32xf32> to vector<2x16x32xf32>
    %12 = vector.shape_cast %11 : vector<2x16x32xf32> to vector<32x32xf32>
    %c0_13 = arith.constant 0 : index
    %c64 = arith.constant 64 : index
    %13 = vector.load %arg8[%c0_13, %c64] : memref<32x96xf32, #tpu.memory_space<vmem>>, vector<32x32xf32>
    tpu.vector_store %arg8[%c0_13, %c64], %12 {strides = array<i32>} : memref<32x96xf32, #tpu.memory_space<vmem>>, vector<32x32xf32>,
    %c0_14 = arith.constant 0 : index
    %c0_15 = arith.constant 0 : index
    %14 = vector.load %arg8[%c0_14, %c0_15] : memref<32x96xf32, #tpu.memory_space<vmem>>, vector<32x96xf32>
    %c0_16 = arith.constant 0 : index
    %c0_17 = arith.constant 0 : index
    %c0_18 = arith.constant 0 : index
    %15 = vector.load %arg1[%c0_16, %c0_17, %c0_18] : memref<2x96x32xf32, #tpu.memory_space<vmem>>, vector<1x96x32xf32>
    %16 = vector.shape_cast %15 : vector<1x96x32xf32> to vector<96x32xf32>
    %cst_19 = arith.constant dense<0.000000e+00> : vector<32x32xf32>
    %17 = tpu.matmul %14, %16, %cst_19 {dimension_numbers = #tpu.dot_dimension_numbers<[1], [0], [0], [1], [0, 0, 1, 1], [], []>} : vector<32x96xf32>, vector<96x32xf32>, vector<32x32xf32> -> vector<32x32xf32>
    %c0_20 = arith.constant 0 : index
    %c0_21 = arith.constant 0 : index
    %c0_22 = arith.constant 0 : index
    %18 = vector.load %arg2[%c0_20, %c0_21, %c0_22] : memref<2x1x32xf32, #tpu.memory_space<vmem>>, vector<1x1x32xf32>
    %19 = vector.shape_cast %18 : vector<1x1x32xf32> to vector<1x32xf32>
    %20 = vector.broadcast %19 : vector<1x32xf32> to vector<32x32xf32>
    %21 = arith.addf %17, %20 : vector<32x32xf32>
    %cst_23 = arith.constant 0.000000e+00 : f32
    %22 = vector.broadcast %cst_23 : f32 to vector<32x32xf32>
    %23 = arith.maximumf %21, %22 : vector<32x32xf32>
    %24 = vector.shape_cast %23 : vector<32x32xf32> to vector<2x16x32xf32>
    %c0_24 = arith.constant 0 : index
    %c8_25 = arith.constant 8 : index
    %c0_26 = arith.constant 0 : index
    %25 = vector.load %arg7[%c0_24, %c8_25, %c0_26] : memref<2x24x32xf32, #tpu.memory_space<vmem>>, vector<2x16x32xf32>
    tpu.vector_store %arg7[%c0_24, %c8_25, %c0_26], %24 {strides = array<i32>} : memref<2x24x32xf32, #tpu.memory_space<vmem>>, vector<2x16x32xf32>,
    %c0_27 = arith.constant 0 : index
    %c0_28 = arith.constant 0 : index
    %c0_29 = arith.constant 0 : index
    %26 = vector.load %arg7[%c0_27, %c0_28, %c0_29] : memref<2x24x32xf32, #tpu.memory_space<vmem>>, vector<2x24x32xf32>
    %27 = vector.extract_strided_slice %26 {offsets = [0, 4, 0], sizes = [2, 16, 32], strides = [1, 1, 1]} : vector<2x24x32xf32> to vector<2x16x32xf32>
    %28 = vector.shape_cast %27 : vector<2x16x32xf32> to vector<32x32xf32>
    %c0_30 = arith.constant 0 : index
    %c0_31 = arith.constant 0 : index
    %29 = vector.load %arg8[%c0_30, %c0_31] : memref<32x96xf32, #tpu.memory_space<vmem>>, vector<32x32xf32>
    tpu.vector_store %arg8[%c0_30, %c0_31], %28 {strides = array<i32>} : memref<32x96xf32, #tpu.memory_space<vmem>>, vector<32x32xf32>,
    %30 = vector.extract_strided_slice %26 {offsets = [0, 6, 0], sizes = [2, 16, 32], strides = [1, 1, 1]} : vector<2x24x32xf32> to vector<2x16x32xf32>
    %31 = vector.shape_cast %30 : vector<2x16x32xf32> to vector<32x32xf32>
    %c0_32 = arith.constant 0 : index
    %c32_33 = arith.constant 32 : index
    %32 = vector.load %arg8[%c0_32, %c32_33] : memref<32x96xf32, #tpu.memory_space<vmem>>, vector<32x32xf32>
    tpu.vector_store %arg8[%c0_32, %c32_33], %31 {strides = array<i32>} : memref<32x96xf32, #tpu.memory_space<vmem>>, vector<32x32xf32>,
    %33 = vector.extract_strided_slice %26 {offsets = [0, 8, 0], sizes = [2, 16, 32], strides = [1, 1, 1]} : vector<2x24x32xf32> to vector<2x16x32xf32>
    %34 = vector.shape_cast %33 : vector<2x16x32xf32> to vector<32x32xf32>
    %c0_34 = arith.constant 0 : index
    %c64_35 = arith.constant 64 : index
    %35 = vector.load %arg8[%c0_34, %c64_35] : memref<32x96xf32, #tpu.memory_space<vmem>>, vector<32x32xf32>
    tpu.vector_store %arg8[%c0_34, %c64_35], %34 {strides = array<i32>} : memref<32x96xf32, #tpu.memory_space<vmem>>, vector<32x32xf32>,
    %c0_36 = arith.constant 0 : index
    %c0_37 = arith.constant 0 : index
    %36 = vector.load %arg8[%c0_36, %c0_37] : memref<32x96xf32, #tpu.memory_space<vmem>>, vector<32x96xf32>
    %c1 = arith.constant 1 : index
    %c0_38 = arith.constant 0 : index
    %c0_39 = arith.constant 0 : index
    %37 = vector.load %arg1[%c1, %c0_38, %c0_39] : memref<2x96x32xf32, #tpu.memory_space<vmem>>, vector<1x96x32xf32>
    %38 = vector.shape_cast %37 : vector<1x96x32xf32> to vector<96x32xf32>
    %cst_40 = arith.constant dense<0.000000e+00> : vector<32x32xf32>
    %39 = tpu.matmul %36, %38, %cst_40 {dimension_numbers = #tpu.dot_dimension_numbers<[1], [0], [0], [1], [0, 0, 1, 1], [], []>} : vector<32x96xf32>, vector<96x32xf32>, vector<32x32xf32> -> vector<32x32xf32>
    %c1_41 = arith.constant 1 : index
    %c0_42 = arith.constant 0 : index
    %c0_43 = arith.constant 0 : index
    %40 = vector.load %arg2[%c1_41, %c0_42, %c0_43] : memref<2x1x32xf32, #tpu.memory_space<vmem>>, vector<1x1x32xf32>
    %41 = vector.shape_cast %40 : vector<1x1x32xf32> to vector<1x32xf32>
    %42 = vector.broadcast %41 : vector<1x32xf32> to vector<32x32xf32>
    %43 = arith.addf %39, %42 : vector<32x32xf32>
    %cst_44 = arith.constant 0.000000e+00 : f32
    %44 = vector.broadcast %cst_44 : f32 to vector<32x32xf32>
    %45 = arith.maximumf %43, %44 : vector<32x32xf32>
    %46 = vector.shape_cast %45 : vector<32x32xf32> to vector<2x16x32xf32>
    %cst_45 = arith.constant dense<0.000000e+00> : vector<2x32xf32>
    %47 = vector.multi_reduction <add>, %46, %cst_45 [1] : vector<2x16x32xf32> to vector<2x32xf32>
    %cst_46 = arith.constant 1.600000e+01 : f32
    %48 = vector.broadcast %cst_46 : f32 to vector<2x32xf32>
    %49 = arith.divf %47, %48 : vector<2x32xf32>
    %50 = tpu.iota {dimensions = array<i32: 1>} : vector<2x8xi32>
    %51 = tpu.iota {dimensions = array<i32: 1>} : vector<1x128xi32>
    %c0_47 = arith.constant 0 : index
    %c0_48 = arith.constant 0 : index
    %c0_49 = arith.constant 0 : index
    %52 = vector.load %arg3[%c0_47, %c0_48, %c0_49] : memref<3x32x8xf32, #tpu.memory_space<vmem>>, vector<1x32x8xf32>
    %53 = vector.shape_cast %52 : vector<1x32x8xf32> to vector<32x8xf32>
    %cst_50 = arith.constant dense<0.000000e+00> : vector<2x8xf32>
    %54 = tpu.matmul %49, %53, %cst_50 {dimension_numbers = #tpu.dot_dimension_numbers<[1], [0], [0], [1], [0, 0, 1, 1], [], []>} : vector<2x32xf32>, vector<32x8xf32>, vector<2x8xf32> -> vector<2x8xf32>
    %c0_51 = arith.constant 0 : index
    %c0_52 = arith.constant 0 : index
    %c0_53 = arith.constant 0 : index
    %55 = vector.load %arg4[%c0_51, %c0_52, %c0_53] : memref<3x1x8xf32, #tpu.memory_space<vmem>>, vector<1x1x8xf32>
    %56 = vector.shape_cast %55 : vector<1x1x8xf32> to vector<1x8xf32>
    %57 = vector.broadcast %56 : vector<1x8xf32> to vector<2x8xf32>
    %58 = arith.addf %54, %57 : vector<2x8xf32>
    %c6_i32 = arith.constant 6 : i32
    %59 = vector.broadcast %c6_i32 : i32 to vector<2x8xi32>
    %60 = arith.cmpi slt, %50, %59 : vector<2x8xi32>
    %cst_54 = arith.constant -1.000000e+30 : f32
    %61 = vector.broadcast %cst_54 : f32 to vector<2x8xf32>
    %62 = arith.select %60, %58, %61 : vector<2x8xi1>, vector<2x8xf32>
    %c0_55 = arith.constant 0 : index
    %c0_56 = arith.constant 0 : index
    %c0_57 = arith.constant 0 : index
    %63 = vector.load %arg5[%c0_55, %c0_56, %c0_57] : memref<3x2x8xf32, #tpu.memory_space<vmem>>, vector<1x2x8xf32>
    %64 = vector.shape_cast %63 : vector<1x2x8xf32> to vector<2x8xf32>
    %cst_58 = arith.constant dense<0xFF800000> : vector<2xf32>
    %65 = vector.multi_reduction <maximumf>, %62, %cst_58 [1] : vector<2x8xf32> to vector<2xf32>
    %66 = vector.shape_cast %65 : vector<2xf32> to vector<2x1xf32>
    %67 = vector.broadcast %66 : vector<2x1xf32> to vector<2x8xf32>
    %68 = arith.subf %62, %67 : vector<2x8xf32>
    %69 = math.exp %68 : vector<2x8xf32>
    %cst_59 = arith.constant dense<0.000000e+00> : vector<2xf32>
    %70 = vector.multi_reduction <add>, %69, %cst_59 [1] : vector<2x8xf32> to vector<2xf32>
    %71 = vector.shape_cast %70 : vector<2xf32> to vector<2x1xf32>
    %72 = math.log %71 : vector<2x1xf32>
    %73 = vector.broadcast %72 : vector<2x1xf32> to vector<2x8xf32>
    %74 = arith.subf %68, %73 : vector<2x8xf32>
    %cst_60 = arith.constant 1.000000e+00 : f32
    %75 = vector.broadcast %cst_60 : f32 to vector<2x8xf32>
    %76 = arith.mulf %75, %64 : vector<2x8xf32>
    %cst_61 = arith.constant 0.000000e+00 : f32
    %77 = vector.broadcast %cst_61 : f32 to vector<2x8xf32>
    %78 = arith.addf %76, %77 : vector<2x8xf32>
    %cst_62 = arith.constant 0.000000e+00 : f32
    %79 = vector.broadcast %cst_62 : f32 to vector<2x8xf32>
    %80 = arith.select %60, %78, %79 : vector<2x8xi1>, vector<2x8xf32>
    %81 = arith.mulf %80, %74 : vector<2x8xf32>
    %cst_63 = arith.constant dense<0.000000e+00> : vector<2xf32>
    %82 = vector.multi_reduction <add>, %81, %cst_63 [1] : vector<2x8xf32> to vector<2xf32>
    %83 = vector.shape_cast %82 : vector<2xf32> to vector<2x1xf32>
    %cst_64 = arith.constant 0.000000e+00 : f32
    %84 = vector.broadcast %cst_64 : f32 to vector<2x1xf32>
    %85 = arith.subf %84, %83 : vector<2x1xf32>
    %cst_65 = arith.constant dense<0.000000e+00> : vector<1xf32>
    %86 = vector.multi_reduction <add>, %85, %cst_65 [0] : vector<2x1xf32> to vector<1xf32>
    %87 = vector.shape_cast %86 : vector<1xf32> to vector<1x1xf32>
    %cst_66 = arith.constant 2.000000e+00 : f32
    %88 = vector.broadcast %cst_66 : f32 to vector<1x1xf32>
    %89 = arith.divf %87, %88 : vector<1x1xf32>
    %90 = vector.broadcast %66 : vector<2x1xf32> to vector<2x8xf32>
    %91 = arith.cmpf oeq, %62, %90 : vector<2x8xf32>
    %c8_i32 = arith.constant 8 : i32
    %92 = vector.broadcast %c8_i32 : i32 to vector<2x8xi32>
    %93 = arith.select %91, %50, %92 : vector<2x8xi1>, vector<2x8xi32>
    %cst_67 = arith.constant dense<2147483647> : vector<2xi32>
    %94 = vector.multi_reduction <minsi>, %93, %cst_67 [1] : vector<2x8xi32> to vector<2xi32>
    %95 = vector.shape_cast %94 : vector<2xi32> to vector<2x1xi32>
    %96 = vector.broadcast %95 : vector<2x1xi32> to vector<2x8xi32>
    %97 = arith.cmpi eq, %50, %96 : vector<2x8xi32>
    %cst_68 = arith.constant 0.000000e+00 : f32
    %98 = vector.broadcast %cst_68 : f32 to vector<2x8xf32>
    %99 = arith.select %97, %64, %98 : vector<2x8xi1>, vector<2x8xf32>
    %cst_69 = arith.constant dense<0.000000e+00> : vector<2xf32>
    %100 = vector.multi_reduction <add>, %99, %cst_69 [1] : vector<2x8xf32> to vector<2xf32>
    %101 = vector.shape_cast %100 : vector<2xf32> to vector<2x1xf32>
    %cst_70 = arith.constant dense<0.000000e+00> : vector<1xf32>
    %102 = vector.multi_reduction <add>, %101, %cst_70 [0] : vector<2x1xf32> to vector<1xf32>
    %103 = vector.shape_cast %102 : vector<1xf32> to vector<1x1xf32>
    %c0_i32 = arith.constant 0 : i32
    %104 = vector.broadcast %c0_i32 : i32 to vector<1x128xi32>
    %105 = arith.cmpi eq, %51, %104 : vector<1x128xi32>
    %cst_71 = arith.constant 0.000000e+00 : f32
    %106 = vector.shape_cast %89 : vector<1x1xf32> to vector<1x1xf32>
    %107 = vector.broadcast %106 : vector<1x1xf32> to vector<1x128xf32>
    %108 = vector.broadcast %cst_71 : f32 to vector<1x128xf32>
    %109 = arith.select %105, %107, %108 : vector<1x128xi1>, vector<1x128xf32>
    %c1_i32 = arith.constant 1 : i32
    %110 = vector.broadcast %c1_i32 : i32 to vector<1x128xi32>
    %111 = arith.cmpi eq, %51, %110 : vector<1x128xi32>
    %cst_72 = arith.constant 0.000000e+00 : f32
    %112 = vector.shape_cast %103 : vector<1x1xf32> to vector<1x1xf32>
    %113 = vector.broadcast %112 : vector<1x1xf32> to vector<1x128xf32>
    %114 = vector.broadcast %cst_72 : f32 to vector<1x128xf32>
    %115 = arith.select %111, %113, %114 : vector<1x128xi1>, vector<1x128xf32>
    %116 = arith.addf %109, %115 : vector<1x128xf32>
    %c0_73 = arith.constant 0 : index
    %c0_74 = arith.constant 0 : index
    %117 = vector.load %arg6[%c0_73, %c0_74] : memref<3x128xf32, #tpu.memory_space<vmem>>, vector<1x128xf32>
    tpu.vector_store %arg6[%c0_73, %c0_74], %116 {strides = array<i32>} : memref<3x128xf32, #tpu.memory_space<vmem>>, vector<1x128xf32>,
    %c1_75 = arith.constant 1 : index
    %c0_76 = arith.constant 0 : index
    %c0_77 = arith.constant 0 : index
    %118 = vector.load %arg3[%c1_75, %c0_76, %c0_77] : memref<3x32x8xf32, #tpu.memory_space<vmem>>, vector<1x32x8xf32>
    %119 = vector.shape_cast %118 : vector<1x32x8xf32> to vector<32x8xf32>
    %cst_78 = arith.constant dense<0.000000e+00> : vector<2x8xf32>
    %120 = tpu.matmul %49, %119, %cst_78 {dimension_numbers = #tpu.dot_dimension_numbers<[1], [0], [0], [1], [0, 0, 1, 1], [], []>} : vector<2x32xf32>, vector<32x8xf32>, vector<2x8xf32> -> vector<2x8xf32>
    %c1_79 = arith.constant 1 : index
    %c0_80 = arith.constant 0 : index
    %c0_81 = arith.constant 0 : index
    %121 = vector.load %arg4[%c1_79, %c0_80, %c0_81] : memref<3x1x8xf32, #tpu.memory_space<vmem>>, vector<1x1x8xf32>
    %122 = vector.shape_cast %121 : vector<1x1x8xf32> to vector<1x8xf32>
    %123 = vector.broadcast %122 : vector<1x8xf32> to vector<2x8xf32>
    %124 = arith.addf %120, %123 : vector<2x8xf32>
    %c6_i32_82 = arith.constant 6 : i32
    %125 = vector.broadcast %c6_i32_82 : i32 to vector<2x8xi32>
    %126 = arith.cmpi slt, %50, %125 : vector<2x8xi32>
    %cst_83 = arith.constant -1.000000e+30 : f32
    %127 = vector.broadcast %cst_83 : f32 to vector<2x8xf32>
    %128 = arith.select %126, %124, %127 : vector<2x8xi1>, vector<2x8xf32>
    %c1_84 = arith.constant 1 : index
    %c0_85 = arith.constant 0 : index
    %c0_86 = arith.constant 0 : index
    %129 = vector.load %arg5[%c1_84, %c0_85, %c0_86] : memref<3x2x8xf32, #tpu.memory_space<vmem>>, vector<1x2x8xf32>
    %130 = vector.shape_cast %129 : vector<1x2x8xf32> to vector<2x8xf32>
    %cst_87 = arith.constant dense<0xFF800000> : vector<2xf32>
    %131 = vector.multi_reduction <maximumf>, %128, %cst_87 [1] : vector<2x8xf32> to vector<2xf32>
    %132 = vector.shape_cast %131 : vector<2xf32> to vector<2x1xf32>
    %133 = vector.broadcast %132 : vector<2x1xf32> to vector<2x8xf32>
    %134 = arith.subf %128, %133 : vector<2x8xf32>
    %135 = math.exp %134 : vector<2x8xf32>
    %cst_88 = arith.constant dense<0.000000e+00> : vector<2xf32>
    %136 = vector.multi_reduction <add>, %135, %cst_88 [1] : vector<2x8xf32> to vector<2xf32>
    %137 = vector.shape_cast %136 : vector<2xf32> to vector<2x1xf32>
    %138 = math.log %137 : vector<2x1xf32>
    %139 = vector.broadcast %138 : vector<2x1xf32> to vector<2x8xf32>
    %140 = arith.subf %134, %139 : vector<2x8xf32>
    %cst_89 = arith.constant 1.000000e+00 : f32
    %141 = vector.broadcast %cst_89 : f32 to vector<2x8xf32>
    %142 = arith.mulf %141, %130 : vector<2x8xf32>
    %cst_90 = arith.constant 0.000000e+00 : f32
    %143 = vector.broadcast %cst_90 : f32 to vector<2x8xf32>
    %144 = arith.addf %142, %143 : vector<2x8xf32>
    %cst_91 = arith.constant 0.000000e+00 : f32
    %145 = vector.broadcast %cst_91 : f32 to vector<2x8xf32>
    %146 = arith.select %126, %144, %145 : vector<2x8xi1>, vector<2x8xf32>
    %147 = arith.mulf %146, %140 : vector<2x8xf32>
    %cst_92 = arith.constant dense<0.000000e+00> : vector<2xf32>
    %148 = vector.multi_reduction <add>, %147, %cst_92 [1] : vector<2x8xf32> to vector<2xf32>
    %149 = vector.shape_cast %148 : vector<2xf32> to vector<2x1xf32>
    %cst_93 = arith.constant 0.000000e+00 : f32
    %150 = vector.broadcast %cst_93 : f32 to vector<2x1xf32>
    %151 = arith.subf %150, %149 : vector<2x1xf32>
    %cst_94 = arith.constant dense<0.000000e+00> : vector<1xf32>
    %152 = vector.multi_reduction <add>, %151, %cst_94 [0] : vector<2x1xf32> to vector<1xf32>
    %153 = vector.shape_cast %152 : vector<1xf32> to vector<1x1xf32>
    %cst_95 = arith.constant 2.000000e+00 : f32
    %154 = vector.broadcast %cst_95 : f32 to vector<1x1xf32>
    %155 = arith.divf %153, %154 : vector<1x1xf32>
    %156 = vector.broadcast %132 : vector<2x1xf32> to vector<2x8xf32>
    %157 = arith.cmpf oeq, %128, %156 : vector<2x8xf32>
    %c8_i32_96 = arith.constant 8 : i32
    %158 = vector.broadcast %c8_i32_96 : i32 to vector<2x8xi32>
    %159 = arith.select %157, %50, %158 : vector<2x8xi1>, vector<2x8xi32>
    %cst_97 = arith.constant dense<2147483647> : vector<2xi32>
    %160 = vector.multi_reduction <minsi>, %159, %cst_97 [1] : vector<2x8xi32> to vector<2xi32>
    %161 = vector.shape_cast %160 : vector<2xi32> to vector<2x1xi32>
    %162 = vector.broadcast %161 : vector<2x1xi32> to vector<2x8xi32>
    %163 = arith.cmpi eq, %50, %162 : vector<2x8xi32>
    %cst_98 = arith.constant 0.000000e+00 : f32
    %164 = vector.broadcast %cst_98 : f32 to vector<2x8xf32>
    %165 = arith.select %163, %130, %164 : vector<2x8xi1>, vector<2x8xf32>
    %cst_99 = arith.constant dense<0.000000e+00> : vector<2xf32>
    %166 = vector.multi_reduction <add>, %165, %cst_99 [1] : vector<2x8xf32> to vector<2xf32>
    %167 = vector.shape_cast %166 : vector<2xf32> to vector<2x1xf32>
    %cst_100 = arith.constant dense<0.000000e+00> : vector<1xf32>
    %168 = vector.multi_reduction <add>, %167, %cst_100 [0] : vector<2x1xf32> to vector<1xf32>
    %169 = vector.shape_cast %168 : vector<1xf32> to vector<1x1xf32>
    %c0_i32_101 = arith.constant 0 : i32
    %170 = vector.broadcast %c0_i32_101 : i32 to vector<1x128xi32>
    %171 = arith.cmpi eq, %51, %170 : vector<1x128xi32>
    %cst_102 = arith.constant 0.000000e+00 : f32
    %172 = vector.shape_cast %155 : vector<1x1xf32> to vector<1x1xf32>
    %173 = vector.broadcast %172 : vector<1x1xf32> to vector<1x128xf32>
    %174 = vector.broadcast %cst_102 : f32 to vector<1x128xf32>
    %175 = arith.select %171, %173, %174 : vector<1x128xi1>, vector<1x128xf32>
    %c1_i32_103 = arith.constant 1 : i32
    %176 = vector.broadcast %c1_i32_103 : i32 to vector<1x128xi32>
    %177 = arith.cmpi eq, %51, %176 : vector<1x128xi32>
    %cst_104 = arith.constant 0.000000e+00 : f32
    %178 = vector.shape_cast %169 : vector<1x1xf32> to vector<1x1xf32>
    %179 = vector.broadcast %178 : vector<1x1xf32> to vector<1x128xf32>
    %180 = vector.broadcast %cst_104 : f32 to vector<1x128xf32>
    %181 = arith.select %177, %179, %180 : vector<1x128xi1>, vector<1x128xf32>
    %182 = arith.addf %175, %181 : vector<1x128xf32>
    %c1_105 = arith.constant 1 : index
    %c0_106 = arith.constant 0 : index
    %183 = vector.load %arg6[%c1_105, %c0_106] : memref<3x128xf32, #tpu.memory_space<vmem>>, vector<1x128xf32>
    tpu.vector_store %arg6[%c1_105, %c0_106], %182 {strides = array<i32>} : memref<3x128xf32, #tpu.memory_space<vmem>>, vector<1x128xf32>,
    %c2 = arith.constant 2 : index
    %c0_107 = arith.constant 0 : index
    %c0_108 = arith.constant 0 : index
    %184 = vector.load %arg3[%c2, %c0_107, %c0_108] : memref<3x32x8xf32, #tpu.memory_space<vmem>>, vector<1x32x8xf32>
    %185 = vector.shape_cast %184 : vector<1x32x8xf32> to vector<32x8xf32>
    %cst_109 = arith.constant dense<0.000000e+00> : vector<2x8xf32>
    %186 = tpu.matmul %49, %185, %cst_109 {dimension_numbers = #tpu.dot_dimension_numbers<[1], [0], [0], [1], [0, 0, 1, 1], [], []>} : vector<2x32xf32>, vector<32x8xf32>, vector<2x8xf32> -> vector<2x8xf32>
    %c2_110 = arith.constant 2 : index
    %c0_111 = arith.constant 0 : index
    %c0_112 = arith.constant 0 : index
    %187 = vector.load %arg4[%c2_110, %c0_111, %c0_112] : memref<3x1x8xf32, #tpu.memory_space<vmem>>, vector<1x1x8xf32>
    %188 = vector.shape_cast %187 : vector<1x1x8xf32> to vector<1x8xf32>
    %189 = vector.broadcast %188 : vector<1x8xf32> to vector<2x8xf32>
    %190 = arith.addf %186, %189 : vector<2x8xf32>
    %c8_i32_113 = arith.constant 8 : i32
    %191 = vector.broadcast %c8_i32_113 : i32 to vector<2x8xi32>
    %192 = arith.cmpi slt, %50, %191 : vector<2x8xi32>
    %cst_114 = arith.constant -1.000000e+30 : f32
    %193 = vector.broadcast %cst_114 : f32 to vector<2x8xf32>
    %194 = arith.select %192, %190, %193 : vector<2x8xi1>, vector<2x8xf32>
    %c2_115 = arith.constant 2 : index
    %c0_116 = arith.constant 0 : index
    %c0_117 = arith.constant 0 : index
    %195 = vector.load %arg5[%c2_115, %c0_116, %c0_117] : memref<3x2x8xf32, #tpu.memory_space<vmem>>, vector<1x2x8xf32>
    %196 = vector.shape_cast %195 : vector<1x2x8xf32> to vector<2x8xf32>
    %cst_118 = arith.constant dense<0xFF800000> : vector<2xf32>
    %197 = vector.multi_reduction <maximumf>, %194, %cst_118 [1] : vector<2x8xf32> to vector<2xf32>
    %198 = vector.shape_cast %197 : vector<2xf32> to vector<2x1xf32>
    %199 = vector.broadcast %198 : vector<2x1xf32> to vector<2x8xf32>
    %200 = arith.subf %194, %199 : vector<2x8xf32>
    %201 = math.exp %200 : vector<2x8xf32>
    %cst_119 = arith.constant dense<0.000000e+00> : vector<2xf32>
    %202 = vector.multi_reduction <add>, %201, %cst_119 [1] : vector<2x8xf32> to vector<2xf32>
    %203 = vector.shape_cast %202 : vector<2xf32> to vector<2x1xf32>
    %204 = math.log %203 : vector<2x1xf32>
    %205 = vector.broadcast %204 : vector<2x1xf32> to vector<2x8xf32>
    %206 = arith.subf %200, %205 : vector<2x8xf32>
    %cst_120 = arith.constant 0.899999976 : f32
    %207 = vector.broadcast %cst_120 : f32 to vector<2x8xf32>
    %208 = arith.mulf %207, %196 : vector<2x8xf32>
    %cst_121 = arith.constant 1.250000e-02 : f32
    %209 = vector.broadcast %cst_121 : f32 to vector<2x8xf32>
    %210 = arith.addf %208, %209 : vector<2x8xf32>
    %cst_122 = arith.constant 0.000000e+00 : f32
    %211 = vector.broadcast %cst_122 : f32 to vector<2x8xf32>
    %212 = arith.select %192, %210, %211 : vector<2x8xi1>, vector<2x8xf32>
    %213 = arith.mulf %212, %206 : vector<2x8xf32>
    %cst_123 = arith.constant dense<0.000000e+00> : vector<2xf32>
    %214 = vector.multi_reduction <add>, %213, %cst_123 [1] : vector<2x8xf32> to vector<2xf32>
    %215 = vector.shape_cast %214 : vector<2xf32> to vector<2x1xf32>
    %cst_124 = arith.constant 0.000000e+00 : f32
    %216 = vector.broadcast %cst_124 : f32 to vector<2x1xf32>
    %217 = arith.subf %216, %215 : vector<2x1xf32>
    %cst_125 = arith.constant dense<0.000000e+00> : vector<1xf32>
    %218 = vector.multi_reduction <add>, %217, %cst_125 [0] : vector<2x1xf32> to vector<1xf32>
    %219 = vector.shape_cast %218 : vector<1xf32> to vector<1x1xf32>
    %cst_126 = arith.constant 2.000000e+00 : f32
    %220 = vector.broadcast %cst_126 : f32 to vector<1x1xf32>
    %221 = arith.divf %219, %220 : vector<1x1xf32>
    %222 = vector.broadcast %198 : vector<2x1xf32> to vector<2x8xf32>
    %223 = arith.cmpf oeq, %194, %222 : vector<2x8xf32>
    %c8_i32_127 = arith.constant 8 : i32
    %224 = vector.broadcast %c8_i32_127 : i32 to vector<2x8xi32>
    %225 = arith.select %223, %50, %224 : vector<2x8xi1>, vector<2x8xi32>
    %cst_128 = arith.constant dense<2147483647> : vector<2xi32>
    %226 = vector.multi_reduction <minsi>, %225, %cst_128 [1] : vector<2x8xi32> to vector<2xi32>
    %227 = vector.shape_cast %226 : vector<2xi32> to vector<2x1xi32>
    %228 = vector.broadcast %227 : vector<2x1xi32> to vector<2x8xi32>
    %229 = arith.cmpi eq, %50, %228 : vector<2x8xi32>
    %cst_129 = arith.constant 0.000000e+00 : f32
    %230 = vector.broadcast %cst_129 : f32 to vector<2x8xf32>
    %231 = arith.select %229, %196, %230 : vector<2x8xi1>, vector<2x8xf32>
    %cst_130 = arith.constant dense<0.000000e+00> : vector<2xf32>
    %232 = vector.multi_reduction <add>, %231, %cst_130 [1] : vector<2x8xf32> to vector<2xf32>
    %233 = vector.shape_cast %232 : vector<2xf32> to vector<2x1xf32>
    %cst_131 = arith.constant dense<0.000000e+00> : vector<1xf32>
    %234 = vector.multi_reduction <add>, %233, %cst_131 [0] : vector<2x1xf32> to vector<1xf32>
    %235 = vector.shape_cast %234 : vector<1xf32> to vector<1x1xf32>
    %c0_i32_132 = arith.constant 0 : i32
    %236 = vector.broadcast %c0_i32_132 : i32 to vector<1x128xi32>
    %237 = arith.cmpi eq, %51, %236 : vector<1x128xi32>
    %cst_133 = arith.constant 0.000000e+00 : f32
    %238 = vector.shape_cast %221 : vector<1x1xf32> to vector<1x1xf32>
    %239 = vector.broadcast %238 : vector<1x1xf32> to vector<1x128xf32>
    %240 = vector.broadcast %cst_133 : f32 to vector<1x128xf32>
    %241 = arith.select %237, %239, %240 : vector<1x128xi1>, vector<1x128xf32>
    %c1_i32_134 = arith.constant 1 : i32
    %242 = vector.broadcast %c1_i32_134 : i32 to vector<1x128xi32>
    %243 = arith.cmpi eq, %51, %242 : vector<1x128xi32>
    %cst_135 = arith.constant 0.000000e+00 : f32
    %244 = vector.shape_cast %235 : vector<1x1xf32> to vector<1x1xf32>
    %245 = vector.broadcast %244 : vector<1x1xf32> to vector<1x128xf32>
    %246 = vector.broadcast %cst_135 : f32 to vector<1x128xf32>
    %247 = arith.select %243, %245, %246 : vector<1x128xi1>, vector<1x128xf32>
    %248 = arith.addf %241, %247 : vector<1x128xf32>
    %c2_136 = arith.constant 2 : index
    %c0_137 = arith.constant 0 : index
    %249 = vector.load %arg6[%c2_136, %c0_137] : memref<3x128xf32, #tpu.memory_space<vmem>>, vector<1x128xf32>
    tpu.vector_store %arg6[%c2_136, %c0_137], %248 {strides = array<i32>} : memref<3x128xf32, #tpu.memory_space<vmem>>, vector<1x128xf32>,
    return
  }
}

</mosaic_0001>

<llo_original>
// kernel: multi_dataset3_forward_all.1
$region0: #{multi_dataset3_forward_all.1}
  #allocation0 [shape = 'u32[]', space=smem, size = 0x4, offset = 0x4, fixed_abs, tag = 'smem constant byte address 0x4 - core index']
  #allocation1 [shape = 'u32[144,128]{1,0:T(1,128)}', space=vmem, size = 0x12000, scoped, tag = 'internal scratch']
  #allocation2 [shape = 'f32[2,24,32]{2,1,0:T(8,128)}', space=vmem, size = 0x6000, scoped, tag = 'scratch operand']
  #allocation3 [shape = 'f32[32,96]{1,0:T(8,128)}', space=vmem, size = 0x4000, scoped, tag = 'scratch operand']
  %s0 = inlined_call_operand.vmem [shape: f32[2,16,32], index: 0, kind: input, shape index: {}]
  %s1 = inlined_call_operand.vmem [shape: f32[2,96,32], index: 1, kind: input, shape index: {}]
  %s2 = inlined_call_operand.vmem [shape: f32[2,1,32], index: 2, kind: input, shape index: {}]
  %s3 = inlined_call_operand.vmem [shape: f32[3,32,8], index: 3, kind: input, shape index: {}]
  %s4 = inlined_call_operand.vmem [shape: f32[3,1,8], index: 4, kind: input, shape index: {}]
  %s5 = inlined_call_operand.vmem [shape: f32[3,2,8], index: 5, kind: input, shape index: {}]
  %s6 = inlined_call_operand.vmem [shape: f32[3,128], index: 6, kind: output, shape index: {}]
  %s7 = sld [smem:[#allocation0]]
  $region34: #{multi_dataset3_forward_all.1} parent=0
    _
  %s9 = ssub.s32 1, %s7
  %s10 = scalar_select 0, %s9, %s7
  // Predicated region
  $region2: #{multi_dataset3_forward_all.1} parent=0 // pred_check
    _
  $region3: #{multi_dataset3_forward_all.1} parent=0 // pred_check_branch
    %12 = sbr.rel (0) target = $region5
  $region4: #{multi_dataset3_forward_all.1} parent=0 // pred_region
    _
  $region5: #{multi_dataset3_forward_all.1} parent=0 // pred_fallthru
    _
  // Predicated region
  $region6: #{multi_dataset3_forward_all.1} parent=0 // pred_check
    _
  $region7: #{multi_dataset3_forward_all.1} parent=0 // pred_check_branch
    %14 = sbr.rel (0) target = $region9
  $region8: #{multi_dataset3_forward_all.1} parent=0 // pred_region
    _
  $region9: #{multi_dataset3_forward_all.1} parent=0 // pred_fallthru
    _
  // Predicated region
  $region10: #{multi_dataset3_forward_all.1} parent=0 // pred_check
    _
  $region11: #{multi_dataset3_forward_all.1} parent=0 // pred_check_branch
    %16 = sbr.rel (0) target = $region13
  $region12: #{multi_dataset3_forward_all.1} parent=0 // pred_region
    _
  $region13: #{multi_dataset3_forward_all.1} parent=0 // pred_fallthru
    _
  // Predicated region
  $region14: #{multi_dataset3_forward_all.1} parent=0 // pred_check
    _
  $region15: #{multi_dataset3_forward_all.1} parent=0 // pred_check_branch
    %18 = sbr.rel (0) target = $region17
  $region16: #{multi_dataset3_forward_all.1} parent=0 // pred_region
    _
  $region17: #{multi_dataset3_forward_all.1} parent=0 // pred_fallthru
    _
  // Predicated region
  $region18: #{multi_dataset3_forward_all.1} parent=0 // pred_check
    _
  $region19: #{multi_dataset3_forward_all.1} parent=0 // pred_check_branch
    %20 = sbr.rel (0) target = $region21
  $region20: #{multi_dataset3_forward_all.1} parent=0 // pred_region
    _
  $region21: #{multi_dataset3_forward_all.1} parent=0 // pred_fallthru
    _
  // Predicated region
  $region22: #{multi_dataset3_forward_all.1} parent=0 // pred_check
    _
  $region23: #{multi_dataset3_forward_all.1} parent=0 // pred_check_branch
    %22 = sbr.rel (0) target = $region25
  $region24: #{multi_dataset3_forward_all.1} parent=0 // pred_region
    _
  $region25: #{multi_dataset3_forward_all.1} parent=0 // pred_fallthru
    _
  %vm23 = vcmask 261120
  %24 = vst.msk [vmem:[#allocation2] sm:$0xff] %vm23, 0.0
  %25 = vst.msk [vmem:[#allocation2 + $0x8] sm:$0xff] %vm23, 0.0
  %26 = vst.msk [vmem:[#allocation2 + $0x10] sm:$0xff] %vm23, 0.0
  %27 = vst.msk [vmem:[#allocation2 + $0x18] sm:$0xff] %vm23, 0.0
  %28 = vst.msk [vmem:[#allocation2 + $0x20] sm:$0xff] %vm23, 0.0
  %29 = vst.msk [vmem:[#allocation2 + $0x28] sm:$0xff] %vm23, 0.0
  %v30 = vld [vmem:[%s0] sm:$0xff]
  %v31 = vld [vmem:[%s0 + $0x8] sm:$0xff]
  %v32 = vld [vmem:[%s0 + $0x10] sm:$0xff]
  %v33 = vld [vmem:[%s0 + $0x18] sm:$0xff]
  %34 = vst.msk [vmem:[#allocation2 + $0x8] sm:$0xff] %vm23, %v30
  %35 = vst.msk [vmem:[#allocation2 + $0x10] sm:$0xff] %vm23, %v31
  %36 = vst.msk [vmem:[#allocation2 + $0x20] sm:$0xff] %vm23, %v32
  %37 = vst.msk [vmem:[#allocation2 + $0x28] sm:$0xff] %vm23, %v33
  %v38 = vld [vmem:[#allocation2] sm:$0xff]
  %v39 = vld [vmem:[#allocation2 + $0x8] sm:$0xff]
  %v40 = vld [vmem:[#allocation2 + $0x10] sm:$0xff]
  %v41 = vld [vmem:[#allocation2 + $0x18] sm:$0xff]
  %v42 = vld [vmem:[#allocation2 + $0x20] sm:$0xff]
  %v43 = vld [vmem:[#allocation2 + $0x28] sm:$0xff]
  %vm50 = vcmask 1041408
  %v51 = vrot.slane %v38, 6
  %v52 = vrot.slane %v39, 6
  %v53 = vsel %vm50, %v51, %v52
  %v54 = vrot.slane %v40, 6
  %v55 = vsel %vm50, %v52, %v54
  %v56 = vrot.slane %v41, 6
  %v57 = vrot.slane %v42, 6
  %v58 = vsel %vm50, %v56, %v57
  %v59 = vrot.slane %v43, 6
  %v60 = vsel %vm50, %v57, %v59
  %65 = vst.msk [vmem:[#allocation3] sm:$0xff] %vm23, %v53
  %66 = vst.msk [vmem:[#allocation3 + $0x8] sm:$0xff] %vm23, %v55
  %67 = vst.msk [vmem:[#allocation3 + $0x10] sm:$0xff] %vm23, %v58
  %68 = vst.msk [vmem:[#allocation3 + $0x18] sm:$0xff] %vm23, %v60
  %vm69 = vcmask 1040384
  %v70 = vrot.slane %v38, 7
  %v71 = vrot.slane %v39, 7
  %v72 = vsel %vm69, %v70, %v71
  %v73 = vrot.slane %v40, 7
  %v74 = vsel %vm69, %v71, %v73
  %v75 = vrot.slane %v41, 7
  %v76 = vrot.slane %v42, 7
  %v77 = vsel %vm69, %v75, %v76
  %v78 = vrot.slane %v43, 7
  %v79 = vsel %vm69, %v76, %v78
  %80 = vrot.lane.b32.xlu0 %v72, 32
  %v81 = vpop.permute.xlu0 %80
  %82 = vrot.lane.b32.xlu0 %v74, 32
  %v83 = vpop.permute.xlu0 %82
  %84 = vrot.lane.b32.xlu0 %v77, 32
  %v85 = vpop.permute.xlu0 %84
  %86 = vrot.lane.b32.xlu0 %v79, 32
  %v87 = vpop.permute.xlu0 %86
  %vm92 = vcmask 523520
  %93 = vst.msk [vmem:[#allocation3] sm:$0xff] %vm92, %v81
  %94 = vst.msk [vmem:[#allocation3 + $0x8] sm:$0xff] %vm92, %v83
  %95 = vst.msk [vmem:[#allocation3 + $0x10] sm:$0xff] %vm92, %v85
  %96 = vst.msk [vmem:[#allocation3 + $0x18] sm:$0xff] %vm92, %v87
  %97 = vrot.lane.b32.xlu0 %v39, 64
  %v98 = vpop.permute.xlu0 %97
  %99 = vrot.lane.b32.xlu0 %v40, 64
  %v100 = vpop.permute.xlu0 %99
  %101 = vrot.lane.b32.xlu0 %v42, 64
  %v102 = vpop.permute.xlu0 %101
  %103 = vrot.lane.b32.xlu0 %v43, 64
  %v104 = vpop.permute.xlu0 %103
  %vm109 = vcmask 785920
  %110 = vst.msk [vmem:[#allocation3] sm:$0xff] %vm109, %v98
  %111 = vst.msk [vmem:[#allocation3 + $0x8] sm:$0xff] %vm109, %v100
  %112 = vst.msk [vmem:[#allocation3 + $0x10] sm:$0xff] %vm109, %v102
  %113 = vst.msk [vmem:[#allocation3 + $0x18] sm:$0xff] %vm109, %v104
  %v114 = vld [vmem:[#allocation3] sm:$0xff]
  %v115 = vld [vmem:[#allocation3 + $0x8] sm:$0xff]
  %v116 = vld [vmem:[#allocation3 + $0x10] sm:$0xff]
  %v117 = vld [vmem:[#allocation3 + $0x18] sm:$0xff]
  %v118 = vld [vmem:[%s1] sm:$0xff]
  %v119 = vld [vmem:[%s1 + $0x8] sm:$0xff]
  %v120 = vld [vmem:[%s1 + $0x10] sm:$0xff]
  %v121 = vld [vmem:[%s1 + $0x18] sm:$0xff]
  %v122 = vld [vmem:[%s1 + $0x20] sm:$0xff]
  %v123 = vld [vmem:[%s1 + $0x28] sm:$0xff]
  %v124 = vld [vmem:[%s1 + $0x30] sm:$0xff]
  %v125 = vld [vmem:[%s1 + $0x38] sm:$0xff]
  %v126 = vld [vmem:[%s1 + $0x40] sm:$0xff]
  %v127 = vld [vmem:[%s1 + $0x48] sm:$0xff]
  %v128 = vld [vmem:[%s1 + $0x50] sm:$0xff]
  %v129 = vld [vmem:[%s1 + $0x58] sm:$0xff]
  %v130 = vld [vmem:[%s2] sm:$0x1]
  %v132 = vlaneseq
  %v133 = vshrl.u32 %v132, 7
  %v134 = vsub.s32 0, %v133
  %v135 = vrot.slane %v130, %v134
  %vm137 = vcmask 785408
  %v139 = vsel %vm137, %v114, 0
  %v142 = vsel %vm137, %v115, 0
  %v145 = vsel %vm137, %v116, 0
  %v148 = vsel %vm137, %v117, 0
  %150 = vmatprep.subr.mxu0 0.0
  %151 = vmatpush1.msra.mxu0 %v118
  %152 = vmatprep.subr.mxu0 0.0
  %153 = vmatpush1.msra.mxu0 %v119
  %154 = vmatprep.subr.mxu0 0.0
  %155 = vmatpush1.msra.mxu0 %v120
  %156 = vmatprep.subr.mxu0 0.0
  %157 = vmatpush1.msra.mxu0 %v121
  %158 = vmatprep.subr.mxu0 0.0
  %159 = vmatpush1.msra.mxu0 %v122
  %160 = vmatprep.subr.mxu0 0.0
  %161 = vmatpush1.msra.mxu0 %v123
  %162 = vmatprep.subr.mxu0 0.0
  %163 = vmatpush1.msra.mxu0 %v124
  %164 = vmatprep.subr.mxu0 0.0
  %165 = vmatpush1.msra.mxu0 %v125
  %166 = vmatprep.subr.mxu0 0.0
  %167 = vmatpush1.msra.mxu0 %v126
  %168 = vmatprep.subr.mxu0 0.0
  %169 = vmatpush1.msra.mxu0 %v127
  %170 = vmatprep.subr.mxu0 0.0
  %171 = vmatpush1.msra.mxu0 %v128
  %172 = vmatprep.subr.mxu0 0.0
  %173 = vmatpush1.msra.mxu0 %v129
  %174 = vmatprep.subr.mxu0 0.0
  %175 = vmatpush1.msra.mxu0 0.0
  %176 = vmatprep.subr.mxu0 0.0
  %177 = vmatpush1.msra.mxu0 0.0
  %178 = vmatprep.subr.mxu0 0.0
  %179 = vmatpush1.msra.mxu0 0.0
  %180 = vmatprep.subr.mxu0 0.0
  %181 = vmatpush1.msra.mxu0 0.0
  %182 = vmatprep.subr.mxu0 0.0
  %183 = vmatpush1.msra.mxu0 0.0
  %184 = vmatprep.subr.mxu0 0.0
  %185 = vmatpush1.msra.mxu0 0.0
  %186 = vmatprep.subr.mxu0 0.0
  %187 = vmatpush1.msra.mxu0 0.0
  %188 = vmatprep.subr.mxu0 0.0
  %189 = vmatpush1.msra.mxu0 0.0
  %190 = vmatprep.subr.mxu0 0.0
  %191 = vmatpush1.msra.mxu0 0.0
  %192 = vmatprep.subr.mxu0 0.0
  %193 = vmatpush1.msra.mxu0 0.0
  %194 = vmatprep.subr.mxu0 0.0
  %195 = vmatpush1.msra.mxu0 0.0
  %196 = vmatprep.subr.mxu0 0.0
  %197 = vmatpush1.msra.mxu0 0.0
  %198 = vmatprep.subr.mxu0 0.0
  %199 = vmatpush1.msra.mxu0 0.0
  %200 = vmatprep.subr.mxu0 0.0
  %201 = vmatpush1.msra.mxu0 0.0
  %202 = vmatprep.subr.mxu0 0.0
  %203 = vmatpush1.msra.mxu0 0.0
  %204 = vmatprep.subr.mxu0 0.0
  %205 = vmatpush1.msra.mxu0 0.0
  %206 = vmatprep.subr.mxu0 0.0
  %207 = vmatpush1.msra.mxu0 0.0
  %208 = vmatprep.subr.mxu0 0.0
  %209 = vmatpush1.msra.mxu0 0.0
  %210 = vmatprep.subr.mxu0 0.0
  %211 = vmatpush1.msra.mxu0 0.0
  %212 = vmatprep.subr.mxu0 0.0
  %213 = vmatpush1.msra.mxu0 0.0
  %214 = vmatprep.mubr.f32.mxu0 0.0
  %215 = vmatmul.mubr.f32.gmra.mrb[0].mxu0 %v139
  %v216 = vpop.f32.mrb[0].mxu0
  %v217 = vadd.f32 %v135, %v216
  %v218 = vpop.f32.mrb[0].mxu0
  %219 = vmatprep.mubr.f32.mxu0 0.0
  %220 = vmatmul.mubr.f32.gmra.mrb[0].mxu0 %v142
  %v221 = vpop.f32.mrb[0].mxu0
  %v222 = vadd.f32 %v135, %v221
  %v223 = vpop.f32.mrb[0].mxu0
  %224 = vmatprep.mubr.f32.mxu0 0.0
  %225 = vmatmul.mubr.f32.gmra.mrb[0].mxu0 %v145
  %v226 = vpop.f32.mrb[0].mxu0
  %v227 = vadd.f32 %v135, %v226
  %v228 = vpop.f32.mrb[0].mxu0
  %229 = vmatprep.mubr.f32.mxu0 0.0
  %230 = vmatmul.mubr.f32.gmra.mrb[0].mxu0 %v148
  %v231 = vpop.f32.mrb[0].mxu0
  %v232 = vadd.f32 %v135, %v231
  %v233 = vpop.f32.mrb[0].mxu0
  %234 = vdwg.mxu0
  %v235 = vmax.f32 %v217, 0.0
  %v236 = vmax.f32 %v222, 0.0
  %v237 = vmax.f32 %v227, 0.0
  %v238 = vmax.f32 %v232, 0.0
  %239 = vst.msk [vmem:[#allocation2 + $0x8] sm:$0xff] %vm23, %v235
  %240 = vst.msk [vmem:[#allocation2 + $0x10] sm:$0xff] %vm23, %v236
  %241 = vst.msk [vmem:[#allocation2 + $0x20] sm:$0xff] %vm23, %v237
  %242 = vst.msk [vmem:[#allocation2 + $0x28] sm:$0xff] %vm23, %v238
  %v243 = vld [vmem:[#allocation2] sm:$0xff]
  %v244 = vld [vmem:[#allocation2 + $0x8] sm:$0xff]
  %v245 = vld [vmem:[#allocation2 + $0x10] sm:$0xff]
  %v246 = vld [vmem:[#allocation2 + $0x18] sm:$0xff]
  %v247 = vld [vmem:[#allocation2 + $0x20] sm:$0xff]
  %v248 = vld [vmem:[#allocation2 + $0x28] sm:$0xff]
  %vm255 = vcmask 1043456
  %v256 = vrot.slane %v243, 4
  %v257 = vrot.slane %v244, 4
  %v258 = vsel %vm255, %v256, %v257
  %v259 = vrot.slane %v245, 4
  %v260 = vsel %vm255, %v257, %v259
  %v261 = vrot.slane %v246, 4
  %v262 = vrot.slane %v247, 4
  %v263 = vsel %vm255, %v261, %v262
  %v264 = vrot.slane %v248, 4
  %v265 = vsel %vm255, %v262, %v264
  %270 = vst.msk [vmem:[#allocation3] sm:$0xff] %vm23, %v258
  %271 = vst.msk [vmem:[#allocation3 + $0x8] sm:$0xff] %vm23, %v260
  %272 = vst.msk [vmem:[#allocation3 + $0x10] sm:$0xff] %vm23, %v263
  %273 = vst.msk [vmem:[#allocation3 + $0x18] sm:$0xff] %vm23, %v265
  %v274 = vrot.slane %v243, 6
  %v275 = vrot.slane %v244, 6
  %v276 = vsel %vm50, %v274, %v275
  %v277 = vrot.slane %v245, 6
  %v278 = vsel %vm50, %v275, %v277
  %v279 = vrot.slane %v246, 6
  %v280 = vrot.slane %v247, 6
  %v281 = vsel %vm50, %v279, %v280
  %v282 = vrot.slane %v248, 6
  %v283 = vsel %vm50, %v280, %v282
  %284 = vrot.lane.b32.xlu0 %v276, 32
  %v285 = vpop.permute.xlu0 %284
  %286 = vrot.lane.b32.xlu0 %v278, 32
  %v287 = vpop.permute.xlu0 %286
  %288 = vrot.lane.b32.xlu0 %v281, 32
  %v289 = vpop.permute.xlu0 %288
  %290 = vrot.lane.b32.xlu0 %v283, 32
  %v291 = vpop.permute.xlu0 %290
  %296 = vst.msk [vmem:[#allocation3] sm:$0xff] %vm92, %v285
  %297 = vst.msk [vmem:[#allocation3 + $0x8] sm:$0xff] %vm92, %v287
  %298 = vst.msk [vmem:[#allocation3 + $0x10] sm:$0xff] %vm92, %v289
  %299 = vst.msk [vmem:[#allocation3 + $0x18] sm:$0xff] %vm92, %v291
  %300 = vrot.lane.b32.xlu0 %v244, 64
  %v301 = vpop.permute.xlu0 %300
  %302 = vrot.lane.b32.xlu0 %v245, 64
  %v303 = vpop.permute.xlu0 %302
  %304 = vrot.lane.b32.xlu0 %v247, 64
  %v305 = vpop.permute.xlu0 %304
  %306 = vrot.lane.b32.xlu0 %v248, 64
  %v307 = vpop.permute.xlu0 %306
  %312 = vst.msk [vmem:[#allocation3] sm:$0xff] %vm109, %v301
  %313 = vst.msk [vmem:[#allocation3 + $0x8] sm:$0xff] %vm109, %v303
  %314 = vst.msk [vmem:[#allocation3 + $0x10] sm:$0xff] %vm109, %v305
  %315 = vst.msk [vmem:[#allocation3 + $0x18] sm:$0xff] %vm109, %v307
  %v316 = vld [vmem:[#allocation3] sm:$0xff]
  %v317 = vld [vmem:[#allocation3 + $0x8] sm:$0xff]
  %v318 = vld [vmem:[#allocation3 + $0x10] sm:$0xff]
  %v319 = vld [vmem:[#allocation3 + $0x18] sm:$0xff]
  %s320 = scalar_lea.vmem %s1, 96
  %v321 = vld [vmem:[%s320] sm:$0xff]
  %v322 = vld [vmem:[%s320 + $0x8] sm:$0xff]
  %v323 = vld [vmem:[%s320 + $0x10] sm:$0xff]
  %v324 = vld [vmem:[%s320 + $0x18] sm:$0xff]
  %v325 = vld [vmem:[%s320 + $0x20] sm:$0xff]
  %v326 = vld [vmem:[%s320 + $0x28] sm:$0xff]
  %v327 = vld [vmem:[%s320 + $0x30] sm:$0xff]
  %v328 = vld [vmem:[%s320 + $0x38] sm:$0xff]
  %v329 = vld [vmem:[%s320 + $0x40] sm:$0xff]
  %v330 = vld [vmem:[%s320 + $0x48] sm:$0xff]
  %v331 = vld [vmem:[%s320 + $0x50] sm:$0xff]
  %v332 = vld [vmem:[%s320 + $0x58] sm:$0xff]
  %s333 = scalar_lea.vmem %s2, 1
  %v334 = vld [vmem:[%s333] sm:$0x1]
  %v336 = vlaneseq
  %v337 = vshrl.u32 %v336, 7
  %v338 = vsub.s32 0, %v337
  %v339 = vrot.slane %v334, %v338
  %v342 = vsel %vm137, %v316, 0
  %v345 = vsel %vm137, %v317, 0
  %v348 = vsel %vm137, %v318, 0
  %v351 = vsel %vm137, %v319, 0
  %353 = vmatprep.subr.mxu0 0.0
  %354 = vmatpush1.msra.mxu0 %v321
  %355 = vmatprep.subr.mxu0 0.0
  %356 = vmatpush1.msra.mxu0 %v322
  %357 = vmatprep.subr.mxu0 0.0
  %358 = vmatpush1.msra.mxu0 %v323
  %359 = vmatprep.subr.mxu0 0.0
  %360 = vmatpush1.msra.mxu0 %v324
  %361 = vmatprep.subr.mxu0 0.0
  %362 = vmatpush1.msra.mxu0 %v325
  %363 = vmatprep.subr.mxu0 0.0
  %364 = vmatpush1.msra.mxu0 %v326
  %365 = vmatprep.subr.mxu0 0.0
  %366 = vmatpush1.msra.mxu0 %v327
  %367 = vmatprep.subr.mxu0 0.0
  %368 = vmatpush1.msra.mxu0 %v328
  %369 = vmatprep.subr.mxu0 0.0
  %370 = vmatpush1.msra.mxu0 %v329
  %371 = vmatprep.subr.mxu0 0.0
  %372 = vmatpush1.msra.mxu0 %v330
  %373 = vmatprep.subr.mxu0 0.0
  %374 = vmatpush1.msra.mxu0 %v331
  %375 = vmatprep.subr.mxu0 0.0
  %376 = vmatpush1.msra.mxu0 %v332
  %377 = vmatprep.subr.mxu0 0.0
  %378 = vmatpush1.msra.mxu0 0.0
  %379 = vmatprep.subr.mxu0 0.0
  %380 = vmatpush1.msra.mxu0 0.0
  %381 = vmatprep.subr.mxu0 0.0
  %382 = vmatpush1.msra.mxu0 0.0
  %383 = vmatprep.subr.mxu0 0.0
  %384 = vmatpush1.msra.mxu0 0.0
  %385 = vmatprep.subr.mxu0 0.0
  %386 = vmatpush1.msra.mxu0 0.0
  %387 = vmatprep.subr.mxu0 0.0
  %388 = vmatpush1.msra.mxu0 0.0
  %389 = vmatprep.subr.mxu0 0.0
  %390 = vmatpush1.msra.mxu0 0.0
  %391 = vmatprep.subr.mxu0 0.0
  %392 = vmatpush1.msra.mxu0 0.0
  %393 = vmatprep.subr.mxu0 0.0
  %394 = vmatpush1.msra.mxu0 0.0
  %395 = vmatprep.subr.mxu0 0.0
  %396 = vmatpush1.msra.mxu0 0.0
  %397 = vmatprep.subr.mxu0 0.0
  %398 = vmatpush1.msra.mxu0 0.0
  %399 = vmatprep.subr.mxu0 0.0
  %400 = vmatpush1.msra.mxu0 0.0
  %401 = vmatprep.subr.mxu0 0.0
  %402 = vmatpush1.msra.mxu0 0.0
  %403 = vmatprep.subr.mxu0 0.0
  %404 = vmatpush1.msra.mxu0 0.0
  %405 = vmatprep.subr.mxu0 0.0
  %406 = vmatpush1.msra.mxu0 0.0
  %407 = vmatprep.subr.mxu0 0.0
  %408 = vmatpush1.msra.mxu0 0.0
  %409 = vmatprep.subr.mxu0 0.0
  %410 = vmatpush1.msra.mxu0 0.0
  %411 = vmatprep.subr.mxu0 0.0
  %412 = vmatpush1.msra.mxu0 0.0
  %413 = vmatprep.subr.mxu0 0.0
  %414 = vmatpush1.msra.mxu0 0.0
  %415 = vmatprep.subr.mxu0 0.0
  %416 = vmatpush1.msra.mxu0 0.0
  %417 = vmatprep.mubr.f32.mxu0 0.0
  %418 = vmatmul.mubr.f32.gmra.mrb[0].mxu0 %v342
  %v419 = vpop.f32.mrb[0].mxu0
  %v420 = vadd.f32 %v339, %v419
  %v421 = vpop.f32.mrb[0].mxu0
  %422 = vmatprep.mubr.f32.mxu0 0.0
  %423 = vmatmul.mubr.f32.gmra.mrb[0].mxu0 %v345
  %v424 = vpop.f32.mrb[0].mxu0
  %v425 = vadd.f32 %v339, %v424
  %v426 = vpop.f32.mrb[0].mxu0
  %427 = vmatprep.mubr.f32.mxu0 0.0
  %428 = vmatmul.mubr.f32.gmra.mrb[0].mxu0 %v348
  %v429 = vpop.f32.mrb[0].mxu0
  %v430 = vadd.f32 %v339, %v429
  %v431 = vpop.f32.mrb[0].mxu0
  %432 = vmatprep.mubr.f32.mxu0 0.0
  %433 = vmatmul.mubr.f32.gmra.mrb[0].mxu0 %v351
  %v434 = vpop.f32.mrb[0].mxu0
  %v435 = vadd.f32 %v339, %v434
  %v436 = vpop.f32.mrb[0].mxu0
  %437 = vdwg.mxu0
  %v438 = vmax.f32 %v420, 0.0
  %v439 = vmax.f32 %v425, 0.0
  %v440 = vmax.f32 %v430, 0.0
  %v441 = vmax.f32 %v435, 0.0
  %v442 = vsel %vm23, %v438, 0.0
  %v443 = vsel %vm23, %v439, 0.0
  %v444 = vadd.f32 %v442, %v443
  %v445 = vrot.slane %v444, 4
  %v446 = vadd.f32 %v444, %v445
  %v447 = vrot.slane %v446, 2
  %v448 = vadd.f32 %v446, %v447
  %v449 = vrot.slane %v448, 1
  %v450 = vadd.f32 %v448, %v449
  %v451 = vsel %vm23, %v440, 0.0
  %v452 = vsel %vm23, %v441, 0.0
  %v453 = vadd.f32 %v451, %v452
  %v454 = vrot.slane %v453, 4
  %v455 = vadd.f32 %v453, %v454
  %v456 = vrot.slane %v455, 2
  %v457 = vadd.f32 %v455, %v456
  %v458 = vrot.slane %v457, 1
  %v459 = vadd.f32 %v457, %v458
  %v460 = vrcp.pop 16.0
  %v461 = vmul.f32 %v450, %v460
  %v462 = vmul.f32 %v459, %v460
  %v463 = vlaneseq
  %v464 = vand.u32 %v463, 127
  %v465 = vld [vmem:[%s3] sm:$0xff]
  %v466 = vld [vmem:[%s3 + $0x8] sm:$0xff]
  %v467 = vld [vmem:[%s3 + $0x10] sm:$0xff]
  %v468 = vld [vmem:[%s3 + $0x18] sm:$0xff]
  %v469 = vld [vmem:[%s4] sm:$0x1]
  %v471 = vlaneseq
  %v472 = vshrl.u32 %v471, 7
  %v473 = vsub.s32 0, %v472
  %v474 = vrot.slane %v469, %v473
  %vm478 = vcmask 1041409
  %v479 = vsel %vm478, %v462, %v461
  %v480 = vsel %vm23, %v479, 0
  %482 = vmatprep.subr.mxu0 0.0
  %483 = vmatpush1.msra.mxu0 %v465
  %484 = vmatprep.subr.mxu0 0.0
  %485 = vmatpush1.msra.mxu0 %v466
  %486 = vmatprep.subr.mxu0 0.0
  %487 = vmatpush1.msra.mxu0 %v467
  %488 = vmatprep.subr.mxu0 0.0
  %489 = vmatpush1.msra.mxu0 %v468
  %490 = vmatprep.subr.mxu0 0.0
  %491 = vmatpush1.msra.mxu0 0.0
  %492 = vmatprep.subr.mxu0 0.0
  %493 = vmatpush1.msra.mxu0 0.0
  %494 = vmatprep.subr.mxu0 0.0
  %495 = vmatpush1.msra.mxu0 0.0
  %496 = vmatprep.subr.mxu0 0.0
  %497 = vmatpush1.msra.mxu0 0.0
  %498 = vmatprep.subr.mxu0 0.0
  %499 = vmatpush1.msra.mxu0 0.0
  %500 = vmatprep.subr.mxu0 0.0
  %501 = vmatpush1.msra.mxu0 0.0
  %502 = vmatprep.subr.mxu0 0.0
  %503 = vmatpush1.msra.mxu0 0.0
  %504 = vmatprep.subr.mxu0 0.0
  %505 = vmatpush1.msra.mxu0 0.0
  %506 = vmatprep.subr.mxu0 0.0
  %507 = vmatpush1.msra.mxu0 0.0
  %508 = vmatprep.subr.mxu0 0.0
  %509 = vmatpush1.msra.mxu0 0.0
  %510 = vmatprep.subr.mxu0 0.0
  %511 = vmatpush1.msra.mxu0 0.0
  %512 = vmatprep.subr.mxu0 0.0
  %513 = vmatpush1.msra.mxu0 0.0
  %514 = vmatprep.subr.mxu0 0.0
  %515 = vmatpush1.msra.mxu0 0.0
  %516 = vmatprep.subr.mxu0 0.0
  %517 = vmatpush1.msra.mxu0 0.0
  %518 = vmatprep.subr.mxu0 0.0
  %519 = vmatpush1.msra.mxu0 0.0
  %520 = vmatprep.subr.mxu0 0.0
  %521 = vmatpush1.msra.mxu0 0.0
  %522 = vmatprep.subr.mxu0 0.0
  %523 = vmatpush1.msra.mxu0 0.0
  %524 = vmatprep.subr.mxu0 0.0
  %525 = vmatpush1.msra.mxu0 0.0
  %526 = vmatprep.subr.mxu0 0.0
  %527 = vmatpush1.msra.mxu0 0.0
  %528 = vmatprep.subr.mxu0 0.0
  %529 = vmatpush1.msra.mxu0 0.0
  %530 = vmatprep.subr.mxu0 0.0
  %531 = vmatpush1.msra.mxu0 0.0
  %532 = vmatprep.subr.mxu0 0.0
  %533 = vmatpush1.msra.mxu0 0.0
  %534 = vmatprep.subr.mxu0 0.0
  %535 = vmatpush1.msra.mxu0 0.0
  %536 = vmatprep.subr.mxu0 0.0
  %537 = vmatpush1.msra.mxu0 0.0
  %538 = vmatprep.subr.mxu0 0.0
  %539 = vmatpush1.msra.mxu0 0.0
  %540 = vmatprep.subr.mxu0 0.0
  %541 = vmatpush1.msra.mxu0 0.0
  %542 = vmatprep.subr.mxu0 0.0
  %543 = vmatpush1.msra.mxu0 0.0
  %544 = vmatprep.subr.mxu0 0.0
  %545 = vmatpush1.msra.mxu0 0.0
  %546 = vmatprep.mubr.f32.mxu0 0.0
  %547 = vmatmul.mubr.f32.gmra.mrb[0].mxu0 %v480
  %v548 = vpop.f32.mrb[0].mxu0
  %v549 = vadd.f32 %v474, %v548
  %v550 = vpop.f32.mrb[0].mxu0
  %551 = vdwg.mxu0
  %vm552 = vcmp.lt.s32.totalorder %v464, 6
  %v553 = vsel %vm552, %v549, -1e+30
  %v554 = vld [vmem:[%s5] sm:$0x3]
  %vm555 = vcmask 58368
  %v556 = vsel %vm555, %v553, -inf
  %557 = vmax.xlane.f32.xlu0 %v556
  %v558 = vpop.xlane.xlu0 %557
  %v559 = vsub.f32 %v553, %v558
  %v560 = vmul.f32 %v559, 1.442695
  %v561 = vpow.pop %v560
  %v562 = vsel %vm555, %v561, 0.0
  %563 = vadd.xlane.f32.xlu0 %v562
  %v564 = vpop.xlane.xlu0 %563
  %v565 = vlog2.pop %v564
  %v566 = vmul.f32 %v565, 0.6931472
  %v567 = vsub.f32 %v559, %v566
  %v568 = vadd.f32 %v554, 0.0
  %v569 = vsel %vm552, %v568, 0.0
  %v570 = vmul.f32 %v569, %v567
  %v571 = vsel %vm555, %v570, 0.0
  %572 = vadd.xlane.f32.xlu0 %v571
  %v573 = vpop.xlane.xlu0 %572
  %v574 = vsub.f32 0.0, %v573
  %v575 = vsel %vm50, %v574, 0.0
  %v576 = vrot.slane %v575, 4
  %v577 = vadd.f32 %v575, %v576
  %v578 = vrot.slane %v577, 2
  %v579 = vadd.f32 %v577, %v578
  %v580 = vrot.slane %v579, 1
  %v581 = vadd.f32 %v579, %v580
  %v582 = vrcp.pop 2.0
  %v583 = vmul.f32 %v581, %v582
  %vm584 = vcmp.eq.f32.partialorder %v553, %v558
  %v585 = vsel %vm584, %v464, 8
  %v586 = vsel %vm555, %v585, 2147483647
  %v587 = vand.u32 %v586, 65535
  %v588 = vshra.s32 %v586, 16
  %v589 = vcvt.s32.f32 %v587
  %v590 = vcvt.s32.f32 %v588
  %591 = vmin.xlane.f32.xlu0 %v590
  %v592 = vpop.xlane.xlu0 %591
  %vm593 = vcmp.eq.f32.partialorder %v590, %v592
  %v594 = vsel %vm593, %v589, inf
  %595 = vmin.xlane.f32.xlu0 %v594
  %v596 = vpop.xlane.xlu0 %595
  %v597 = vcvt.f32.s32 %v596
  %v598 = vcvt.f32.s32 %v592
  %v599 = vshll.u32 %v598, 16
  %v600 = vadd.s32 %v599, %v597
  %vm601 = vcmp.eq.s32.totalorder %v464, %v600
  %v602 = vsel %vm601, %v554, 0.0
  %v603 = vsel %vm555, %v602, 0.0
  %604 = vadd.xlane.f32.xlu0 %v603
  %v605 = vpop.xlane.xlu0 %604
  %v606 = vsel %vm50, %v605, 0.0
  %v607 = vrot.slane %v606, 4
  %v608 = vadd.f32 %v606, %v607
  %v609 = vrot.slane %v608, 2
  %v610 = vadd.f32 %v608, %v609
  %v611 = vrot.slane %v610, 1
  %v612 = vadd.f32 %v610, %v611
  %vm613 = vcmp.eq.s32.totalorder %v464, 0
  %v614 = vsel %vm613, %v583, 0.0
  %vm615 = vcmp.eq.s32.totalorder %v464, 1
  %v616 = vsel %vm615, %v612, 0.0
  %v617 = vadd.f32 %v614, %v616
  %618 = vst [vmem:[%s6] sm:$0x1] %v617
  %s619 = scalar_lea.vmem %s3, 32
  %v620 = vld [vmem:[%s619] sm:$0xff]
  %v621 = vld [vmem:[%s619 + $0x8] sm:$0xff]
  %v622 = vld [vmem:[%s619 + $0x10] sm:$0xff]
  %v623 = vld [vmem:[%s619 + $0x18] sm:$0xff]
  %s624 = scalar_lea.vmem %s4, 1
  %v625 = vld [vmem:[%s624] sm:$0x1]
  %v627 = vlaneseq
  %v628 = vshrl.u32 %v627, 7
  %v629 = vsub.s32 0, %v628
  %v630 = vrot.slane %v625, %v629
  %632 = vmatprep.subr.mxu0 0.0
  %633 = vmatpush1.msra.mxu0 %v620
  %634 = vmatprep.subr.mxu0 0.0
  %635 = vmatpush1.msra.mxu0 %v621
  %636 = vmatprep.subr.mxu0 0.0
  %637 = vmatpush1.msra.mxu0 %v622
  %638 = vmatprep.subr.mxu0 0.0
  %639 = vmatpush1.msra.mxu0 %v623
  %640 = vmatprep.subr.mxu0 0.0
  %641 = vmatpush1.msra.mxu0 0.0
  %642 = vmatprep.subr.mxu0 0.0
  %643 = vmatpush1.msra.mxu0 0.0
  %644 = vmatprep.subr.mxu0 0.0
  %645 = vmatpush1.msra.mxu0 0.0
  %646 = vmatprep.subr.mxu0 0.0
  %647 = vmatpush1.msra.mxu0 0.0
  %648 = vmatprep.subr.mxu0 0.0
  %649 = vmatpush1.msra.mxu0 0.0
  %650 = vmatprep.subr.mxu0 0.0
  %651 = vmatpush1.msra.mxu0 0.0
  %652 = vmatprep.subr.mxu0 0.0
  %653 = vmatpush1.msra.mxu0 0.0
  %654 = vmatprep.subr.mxu0 0.0
  %655 = vmatpush1.msra.mxu0 0.0
  %656 = vmatprep.subr.mxu0 0.0
  %657 = vmatpush1.msra.mxu0 0.0
  %658 = vmatprep.subr.mxu0 0.0
  %659 = vmatpush1.msra.mxu0 0.0
  %660 = vmatprep.subr.mxu0 0.0
  %661 = vmatpush1.msra.mxu0 0.0
  %662 = vmatprep.subr.mxu0 0.0
  %663 = vmatpush1.msra.mxu0 0.0
  %664 = vmatprep.subr.mxu0 0.0
  %665 = vmatpush1.msra.mxu0 0.0
  %666 = vmatprep.subr.mxu0 0.0
  %667 = vmatpush1.msra.mxu0 0.0
  %668 = vmatprep.subr.mxu0 0.0
  %669 = vmatpush1.msra.mxu0 0.0
  %670 = vmatprep.subr.mxu0 0.0
  %671 = vmatpush1.msra.mxu0 0.0
  %672 = vmatprep.subr.mxu0 0.0
  %673 = vmatpush1.msra.mxu0 0.0
  %674 = vmatprep.subr.mxu0 0.0
  %675 = vmatpush1.msra.mxu0 0.0
  %676 = vmatprep.subr.mxu0 0.0
  %677 = vmatpush1.msra.mxu0 0.0
  %678 = vmatprep.subr.mxu0 0.0
  %679 = vmatpush1.msra.mxu0 0.0
  %680 = vmatprep.subr.mxu0 0.0
  %681 = vmatpush1.msra.mxu0 0.0
  %682 = vmatprep.subr.mxu0 0.0
  %683 = vmatpush1.msra.mxu0 0.0
  %684 = vmatprep.subr.mxu0 0.0
  %685 = vmatpush1.msra.mxu0 0.0
  %686 = vmatprep.subr.mxu0 0.0
  %687 = vmatpush1.msra.mxu0 0.0
  %688 = vmatprep.subr.mxu0 0.0
  %689 = vmatpush1.msra.mxu0 0.0
  %690 = vmatprep.subr.mxu0 0.0
  %691 = vmatpush1.msra.mxu0 0.0
  %692 = vmatprep.subr.mxu0 0.0
  %693 = vmatpush1.msra.mxu0 0.0
  %694 = vmatprep.subr.mxu0 0.0
  %695 = vmatpush1.msra.mxu0 0.0
  %696 = vmatprep.mubr.f32.mxu0 0.0
  %697 = vmatmul.mubr.f32.gmra.mrb[0].mxu0 %v480
  %v698 = vpop.f32.mrb[0].mxu0
  %v699 = vadd.f32 %v630, %v698
  %v700 = vpop.f32.mrb[0].mxu0
  %701 = vdwg.mxu0
  %v702 = vsel %vm552, %v699, -1e+30
  %s703 = scalar_lea.vmem %s5, 2
  %v704 = vld [vmem:[%s703] sm:$0x3]
  %v705 = vsel %vm555, %v702, -inf
  %706 = vmax.xlane.f32.xlu0 %v705
  %v707 = vpop.xlane.xlu0 %706
  %v708 = vsub.f32 %v702, %v707
  %v709 = vmul.f32 %v708, 1.442695
  %v710 = vpow.pop %v709
  %v711 = vsel %vm555, %v710, 0.0
  %712 = vadd.xlane.f32.xlu0 %v711
  %v713 = vpop.xlane.xlu0 %712
  %v714 = vlog2.pop %v713
  %v715 = vmul.f32 %v714, 0.6931472
  %v716 = vsub.f32 %v708, %v715
  %v717 = vadd.f32 %v704, 0.0
  %v718 = vsel %vm552, %v717, 0.0
  %v719 = vmul.f32 %v718, %v716
  %v720 = vsel %vm555, %v719, 0.0
  %721 = vadd.xlane.f32.xlu0 %v720
  %v722 = vpop.xlane.xlu0 %721
  %v723 = vsub.f32 0.0, %v722
  %v724 = vsel %vm50, %v723, 0.0
  %v725 = vrot.slane %v724, 4
  %v726 = vadd.f32 %v724, %v725
  %v727 = vrot.slane %v726, 2
  %v728 = vadd.f32 %v726, %v727
  %v729 = vrot.slane %v728, 1
  %v730 = vadd.f32 %v728, %v729
  %v731 = vmul.f32 %v730, %v582
  %vm732 = vcmp.eq.f32.partialorder %v702, %v707
  %v733 = vsel %vm732, %v464, 8
  %v734 = vsel %vm555, %v733, 2147483647
  %v735 = vand.u32 %v734, 65535
  %v736 = vshra.s32 %v734, 16
  %v737 = vcvt.s32.f32 %v735
  %v738 = vcvt.s32.f32 %v736
  %739 = vmin.xlane.f32.xlu0 %v738
  %v740 = vpop.xlane.xlu0 %739
  %vm741 = vcmp.eq.f32.partialorder %v738, %v740
  %v742 = vsel %vm741, %v737, inf
  %743 = vmin.xlane.f32.xlu0 %v742
  %v744 = vpop.xlane.xlu0 %743
  %v745 = vcvt.f32.s32 %v744
  %v746 = vcvt.f32.s32 %v740
  %v747 = vshll.u32 %v746, 16
  %v748 = vadd.s32 %v747, %v745
  %vm749 = vcmp.eq.s32.totalorder %v464, %v748
  %v750 = vsel %vm749, %v704, 0.0
  %v751 = vsel %vm555, %v750, 0.0
  %752 = vadd.xlane.f32.xlu0 %v751
  %v753 = vpop.xlane.xlu0 %752
  %v754 = vsel %vm50, %v753, 0.0
  %v755 = vrot.slane %v754, 4
  %v756 = vadd.f32 %v754, %v755
  %v757 = vrot.slane %v756, 2
  %v758 = vadd.f32 %v756, %v757
  %v759 = vrot.slane %v758, 1
  %v760 = vadd.f32 %v758, %v759
  %v761 = vsel %vm613, %v731, 0.0
  %v762 = vsel %vm615, %v760, 0.0
  %v763 = vadd.f32 %v761, %v762
  %764 = vst [vmem:[%s6 + $0x1] sm:$0x1] %v763
  %s765 = scalar_lea.vmem %s3, 64
  %v766 = vld [vmem:[%s765] sm:$0xff]
  %v767 = vld [vmem:[%s765 + $0x8] sm:$0xff]
  %v768 = vld [vmem:[%s765 + $0x10] sm:$0xff]
  %v769 = vld [vmem:[%s765 + $0x18] sm:$0xff]
  %s770 = scalar_lea.vmem %s4, 2
  %v771 = vld [vmem:[%s770] sm:$0x1]
  %v773 = vlaneseq
  %v774 = vshrl.u32 %v773, 7
  %v775 = vsub.s32 0, %v774
  %v776 = vrot.slane %v771, %v775
  %778 = vmatprep.subr.mxu0 0.0
  %779 = vmatpush1.msra.mxu0 %v766
  %780 = vmatprep.subr.mxu0 0.0
  %781 = vmatpush1.msra.mxu0 %v767
  %782 = vmatprep.subr.mxu0 0.0
  %783 = vmatpush1.msra.mxu0 %v768
  %784 = vmatprep.subr.mxu0 0.0
  %785 = vmatpush1.msra.mxu0 %v769
  %786 = vmatprep.subr.mxu0 0.0
  %787 = vmatpush1.msra.mxu0 0.0
  %788 = vmatprep.subr.mxu0 0.0
  %789 = vmatpush1.msra.mxu0 0.0
  %790 = vmatprep.subr.mxu0 0.0
  %791 = vmatpush1.msra.mxu0 0.0
  %792 = vmatprep.subr.mxu0 0.0
  %793 = vmatpush1.msra.mxu0 0.0
  %794 = vmatprep.subr.mxu0 0.0
  %795 = vmatpush1.msra.mxu0 0.0
  %796 = vmatprep.subr.mxu0 0.0
  %797 = vmatpush1.msra.mxu0 0.0
  %798 = vmatprep.subr.mxu0 0.0
  %799 = vmatpush1.msra.mxu0 0.0
  %800 = vmatprep.subr.mxu0 0.0
  %801 = vmatpush1.msra.mxu0 0.0
  %802 = vmatprep.subr.mxu0 0.0
  %803 = vmatpush1.msra.mxu0 0.0
  %804 = vmatprep.subr.mxu0 0.0
  %805 = vmatpush1.msra.mxu0 0.0
  %806 = vmatprep.subr.mxu0 0.0
  %807 = vmatpush1.msra.mxu0 0.0
  %808 = vmatprep.subr.mxu0 0.0
  %809 = vmatpush1.msra.mxu0 0.0
  %810 = vmatprep.subr.mxu0 0.0
  %811 = vmatpush1.msra.mxu0 0.0
  %812 = vmatprep.subr.mxu0 0.0
  %813 = vmatpush1.msra.mxu0 0.0
  %814 = vmatprep.subr.mxu0 0.0
  %815 = vmatpush1.msra.mxu0 0.0
  %816 = vmatprep.subr.mxu0 0.0
  %817 = vmatpush1.msra.mxu0 0.0
  %818 = vmatprep.subr.mxu0 0.0
  %819 = vmatpush1.msra.mxu0 0.0
  %820 = vmatprep.subr.mxu0 0.0
  %821 = vmatpush1.msra.mxu0 0.0
  %822 = vmatprep.subr.mxu0 0.0
  %823 = vmatpush1.msra.mxu0 0.0
  %824 = vmatprep.subr.mxu0 0.0
  %825 = vmatpush1.msra.mxu0 0.0
  %826 = vmatprep.subr.mxu0 0.0
  %827 = vmatpush1.msra.mxu0 0.0
  %828 = vmatprep.subr.mxu0 0.0
  %829 = vmatpush1.msra.mxu0 0.0
  %830 = vmatprep.subr.mxu0 0.0
  %831 = vmatpush1.msra.mxu0 0.0
  %832 = vmatprep.subr.mxu0 0.0
  %833 = vmatpush1.msra.mxu0 0.0
  %834 = vmatprep.subr.mxu0 0.0
  %835 = vmatpush1.msra.mxu0 0.0
  %836 = vmatprep.subr.mxu0 0.0
  %837 = vmatpush1.msra.mxu0 0.0
  %838 = vmatprep.subr.mxu0 0.0
  %839 = vmatpush1.msra.mxu0 0.0
  %840 = vmatprep.subr.mxu0 0.0
  %841 = vmatpush1.msra.mxu0 0.0
  %842 = vmatprep.mubr.f32.mxu0 0.0
  %843 = vmatmul.mubr.f32.gmra.mrb[0].mxu0 %v480
  %v844 = vpop.f32.mrb[0].mxu0
  %v845 = vadd.f32 %v776, %v844
  %v846 = vpop.f32.mrb[0].mxu0
  %847 = vdwg.mxu0
  %vm848 = vcmp.lt.s32.totalorder %v464, 8
  %v849 = vsel %vm848, %v845, -1e+30
  %s850 = scalar_lea.vmem %s5, 4
  %v851 = vld [vmem:[%s850] sm:$0x3]
  %v852 = vsel %vm555, %v849, -inf
  %853 = vmax.xlane.f32.xlu0 %v852
  %v854 = vpop.xlane.xlu0 %853
  %v855 = vsub.f32 %v849, %v854
  %v856 = vmul.f32 %v855, 1.442695
  %v857 = vpow.pop %v856
  %v858 = vsel %vm555, %v857, 0.0
  %859 = vadd.xlane.f32.xlu0 %v858
  %v860 = vpop.xlane.xlu0 %859
  %v861 = vlog2.pop %v860
  %v862 = vmul.f32 %v861, 0.6931472
  %v863 = vsub.f32 %v855, %v862
  %v864 = vmul.f32 %v851, 0.9
  %v865 = vadd.f32 %v864, 0.0125
  %v866 = vsel %vm848, %v865, 0.0
  %v867 = vmul.f32 %v866, %v863
  %v868 = vsel %vm555, %v867, 0.0
  %869 = vadd.xlane.f32.xlu0 %v868
  %v870 = vpop.xlane.xlu0 %869
  %v871 = vsub.f32 0.0, %v870
  %v872 = vsel %vm50, %v871, 0.0
  %v873 = vrot.slane %v872, 4
  %v874 = vadd.f32 %v872, %v873
  %v875 = vrot.slane %v874, 2
  %v876 = vadd.f32 %v874, %v875
  %v877 = vrot.slane %v876, 1
  %v878 = vadd.f32 %v876, %v877
  %v879 = vmul.f32 %v878, %v582
  %vm880 = vcmp.eq.f32.partialorder %v849, %v854
  %v881 = vsel %vm880, %v464, 8
  %v882 = vsel %vm555, %v881, 2147483647
  %v883 = vand.u32 %v882, 65535
  %v884 = vshra.s32 %v882, 16
  %v885 = vcvt.s32.f32 %v883
  %v886 = vcvt.s32.f32 %v884
  %887 = vmin.xlane.f32.xlu0 %v886
  %v888 = vpop.xlane.xlu0 %887
  %vm889 = vcmp.eq.f32.partialorder %v886, %v888
  %v890 = vsel %vm889, %v885, inf
  %891 = vmin.xlane.f32.xlu0 %v890
  %v892 = vpop.xlane.xlu0 %891
  %v893 = vcvt.f32.s32 %v892
  %v894 = vcvt.f32.s32 %v888
  %v895 = vshll.u32 %v894, 16
  %v896 = vadd.s32 %v895, %v893
  %vm897 = vcmp.eq.s32.totalorder %v464, %v896
  %v898 = vsel %vm897, %v851, 0.0
  %v899 = vsel %vm555, %v898, 0.0
  %900 = vadd.xlane.f32.xlu0 %v899
  %v901 = vpop.xlane.xlu0 %900
  %v902 = vsel %vm50, %v901, 0.0
  %v903 = vrot.slane %v902, 4
  %v904 = vadd.f32 %v902, %v903
  %v905 = vrot.slane %v904, 2
  %v906 = vadd.f32 %v904, %v905
  %v907 = vrot.slane %v906, 1
  %v908 = vadd.f32 %v906, %v907
  %v909 = vsel %vm613, %v879, 0.0
  %v910 = vsel %vm615, %v908, 0.0
  %v911 = vadd.f32 %v909, %v910
  %912 = vst [vmem:[%s6 + $0x2] sm:$0x1] %v911
  // Predicated region
  $region26: #{multi_dataset3_forward_all.1} parent=0 // pred_check
    _
  $region27: #{multi_dataset3_forward_all.1} parent=0 // pred_check_branch
    %914 = sbr.rel (0) target = $region29
  $region28: #{multi_dataset3_forward_all.1} parent=0 // pred_region
    _
  $region29: #{multi_dataset3_forward_all.1} parent=0 // pred_fallthru
    _
  // Predicated region
  $region30: #{multi_dataset3_forward_all.1} parent=0 // pred_check
    _
  $region31: #{multi_dataset3_forward_all.1} parent=0 // pred_check_branch
    %916 = sbr.rel (0) target = $region33
  $region32: #{multi_dataset3_forward_all.1} parent=0 // pred_region
    _
  $region33: #{multi_dataset3_forward_all.1} parent=0 // pred_fallthru
    _

</llo_original>
